<compile_context>
chip_gen: v7x
topology: tpu7x:2x2x1
jax: 0.10.0
libtpu: 0.0.40
codegen_flags: <defaults>
</compile_context>

<pallas_src>
import functools

import jax
import jax.numpy as jnp
from jax import lax
from jax.experimental import pallas as pl
from jax.experimental.pallas import tpu as pltpu
import numpy as np

_SUB = 8  # sublane rows per batch group


def _round_up(x, m):
    return ((x + m - 1) // m) * m


def lstm_fc_kernel(x_ref, wih_ref, whh_ref, b_ref,
                   fc1w_ref, fc1b_ref, fcw_ref, fcb_ref,
                   out_ref, h_ref, c_ref, xproj_ref, *, unroll):
    """One grid step = one (batch-group, time-chunk) tile of Tc timesteps.

    x_ref    : (Tc*8, D)  bf16   time-major chunk; rows [t*8:(t+1)*8] = step t
    wih_ref  : (D, 4H)    bf16   W_ih^T, gate columns ordered [i, f, o, g]
    whh_ref  : (H, 4H)    bf16   W_hh^T, same column order
    b_ref    : (1, 4H)    f32    b_ih + b_hh, same column order
    fc1w_ref : (H, 128)   bf16   fc_1 weight^T
    fc1b_ref : (1, 128)   f32
    fcw_ref  : (128, Cp)  bf16   fc weight^T (zero-padded to Cp lanes)
    fcb_ref  : (1, Cp)    f32
    out_ref  : (8, Cp)    f32    lane-dense padded output for this batch group
    h_ref    : (8, H)     f32    VMEM scratch (persists across time chunks)
    c_ref    : (8, H)     f32    VMEM scratch (persists across time chunks)
    xproj_ref: (Tc*8, 4H) f32    VMEM scratch for hoisted input projection
    """
    chunk = pl.program_id(1)
    H = whh_ref.shape[0]
    Bg = h_ref.shape[0]
    Tc = x_ref.shape[0] // Bg

    @pl.when(chunk == 0)
    def _():
        h_ref[...] = jnp.zeros_like(h_ref)
        c_ref[...] = jnp.zeros_like(c_ref)

    # Hoisted input projection for the whole chunk: one MXU call with M = Tc*8.
    xproj_ref[...] = (
        jnp.dot(x_ref[...], wih_ref[...], preferred_element_type=jnp.float32)
        + b_ref[...])

    def step(t, carry):
        h, c = carry
        row = pl.multiple_of(t * Bg, Bg)
        # Only the recurrent matmul stays on the serial dependency chain.
        gates = (xproj_ref[pl.ds(row, Bg), :]
                 + jnp.dot(h.astype(jnp.bfloat16), whh_ref[...],
                           preferred_element_type=jnp.float32))   # (Bg, 4H) f32
        # Gate order [i, f, o, g]: one contiguous sigmoid over 3H lanes, one
        # tanh over the last H lanes (all slices on 128-lane boundaries).
        ifo = jax.nn.sigmoid(gates[:, :3 * H])
        g = jnp.tanh(gates[:, 3 * H:])
        i = ifo[:, 0 * H:1 * H]
        f = ifo[:, 1 * H:2 * H]
        o = ifo[:, 2 * H:3 * H]
        c_new = f * c + i * g
        h_new = o * jnp.tanh(c_new)
        return (h_new, c_new)

    # Bounded unroll: enough to overlap step t's EUP/VPU work with step t+1's
    # MXU push, without exploding instruction memory / vreg pressure.
    h, c = lax.fori_loop(0, Tc, step, (h_ref[...], c_ref[...]), unroll=unroll)
    h_ref[...] = h
    c_ref[...] = c

    @pl.when(chunk == pl.num_programs(1) - 1)
    def _():
        # hn = output[:, -1, :] -> ReLU -> fc_1 -> ReLU -> fc
        z = jnp.maximum(h, 0.0)
        z = jnp.dot(z.astype(jnp.bfloat16), fc1w_ref[...],
                    preferred_element_type=jnp.float32) + fc1b_ref[...]
        z = jnp.maximum(z, 0.0)
        z = jnp.dot(z.astype(jnp.bfloat16), fcw_ref[...],
                    preferred_element_type=jnp.float32) + fcb_ref[...]
        out_ref[...] = z.astype(out_ref.dtype)


def lstm_model_forward(x_btd, params, *, time_chunk=None, unroll=4):
    """x_btd: (B, T, D) float32, PyTorch batch_first convention."""
    B, T, D = x_btd.shape
    H = params["whh_t"].shape[0]
    Cp = params["fcw_t"].shape[1]
    C = params["num_classes"]

    Bp = _round_up(max(B, _SUB), _SUB)           # pad batch to full sublanes
    G = Bp // _SUB                               # batch groups of 8 rows

    if time_chunk is None:
        # Bound the chunk so the (Tc*8, 4H) f32 xproj scratch stays small
        # (v7x: 64 MiB VMEM): largest divisor of T that is <= 256.
        time_chunk = max(d for d in range(1, T + 1) if T % d == 0 and d <= 256)
    Tc = time_chunk
    assert T % Tc == 0, "time_chunk must divide T"
    n_chunks = T // Tc

    # Pad batch, reorder to (group, chunk, step, sublane-row, feature) and
    # flatten rows so block (g, t) covers rows [(g*n_chunks+t)*Tc*8 : ...).
    x_pad = jnp.zeros((Bp, T, D), jnp.float32).at[:B].set(x_btd)
    x_flat = (x_pad.reshape(G, _SUB, n_chunks, Tc, D)
              .transpose(0, 2, 3, 1, 4)
              .reshape(G * T * _SUB, D)
              .astype(jnp.bfloat16))

    def full_spec(shape):
        n = len(shape)
        return pl.BlockSpec(shape, lambda g, t, _n=n: (0,) * _n)

    # Computed VMEM budget: double-buffered x chunk (bf16) + f32 xproj scratch
    # + bf16 weights (2-buffered) + carries/output, with ~1 MiB headroom.
    weights_bytes = 2 * 2 * (D * 4 * H + H * 4 * H + H * 128 + 128 * Cp)
    budget = (2 * Tc * _SUB * D * 2 + Tc * _SUB * 4 * H * 4 + weights_bytes
              + 4 * _SUB * H * 4 + 2 * _SUB * Cp * 4 + (1 << 20))
    vmem_limit = int(min(64 * 2 ** 20, max(32 * 2 ** 20, budget)))

    kernel = functools.partial(lstm_fc_kernel,
                               unroll=max(1, min(int(unroll), Tc)))

    out = pl.pallas_call(
        kernel,
        out_shape=jax.ShapeDtypeStruct((Bp, Cp), jnp.float32),
        grid_spec=pltpu.PrefetchScalarGridSpec(
            num_scalar_prefetch=0,
            grid=(G, n_chunks),
            in_specs=[
                # stream x chunks per (batch-group, time-chunk)
                pl.BlockSpec((Tc * _SUB, D),
                             lambda g, t, _n=n_chunks: (g * _n + t, 0)),
                full_spec(params["wih_t"].shape),
                full_spec(params["whh_t"].shape),
                full_spec(params["b"].shape),
                full_spec(params["fc1w_t"].shape),
                full_spec(params["fc1b"].shape),
                full_spec(params["fcw_t"].shape),
                full_spec(params["fcb"].shape),
            ],
            out_specs=pl.BlockSpec((_SUB, Cp), lambda g, t: (g, 0)),
            scratch_shapes=[
                pltpu.VMEM((_SUB, H), jnp.float32),            # h carry
                pltpu.VMEM((_SUB, H), jnp.float32),            # c carry
                pltpu.VMEM((Tc * _SUB, 4 * H), jnp.float32),   # hoisted x proj
            ],
        ),
        compiler_params=pltpu.CompilerParams(
            # time recurrence is serial; batch groups can split across v7x TCs
            dimension_semantics=("parallel", "arbitrary"),
            vmem_limit_bytes=vmem_limit,
        ),
    )(x_flat,
      params["wih_t"], params["whh_t"], params["b"],
      params["fc1w_t"], params["fc1b"], params["fcw_t"], params["fcb"])

    return out[:B, :C]


def init_params(key, input_size, hidden_size, num_classes):
    """Deterministic synthetic params (PyTorch-like uniform init)."""
    H = hidden_size
    ks = jax.random.split(key, 8)
    s_lstm = 1.0 / np.sqrt(H)
    s_fc1 = 1.0 / np.sqrt(H)
    s_fc = 1.0 / np.sqrt(128)
    u = lambda k, shp, s: jax.random.uniform(k, shp, jnp.float32, -s, s)

    # PyTorch packed layout: gate rows stacked [i, f, g, o]
    w_ih = u(ks[0], (4 * H, input_size), s_lstm)
    w_hh = u(ks[1], (4 * H, H), s_lstm)
    b_ih = u(ks[2], (4 * H,), s_lstm)
    b_hh = u(ks[3], (4 * H,), s_lstm)
    fc1_w = u(ks[4], (128, H), s_fc1)
    fc1_b = u(ks[5], (128,), s_fc1)
    fc_w = u(ks[6], (num_classes, 128), s_fc)
    fc_b = u(ks[7], (num_classes,), s_fc)

    # Permute packed gate rows [i, f, g, o] -> [i, f, o, g] so the kernel runs
    # one contiguous sigmoid over 3H lanes and one tanh over H lanes.
    perm = jnp.concatenate([jnp.arange(0, 2 * H),
                            jnp.arange(3 * H, 4 * H),
                            jnp.arange(2 * H, 3 * H)])
    w_ih = w_ih[perm]
    w_hh = w_hh[perm]
    b = (b_ih + b_hh)[perm]

    c_pad = _round_up(num_classes, 128)                       # lane-dense output
    fcw_t = jnp.zeros((128, c_pad), jnp.float32).at[:, :num_classes].set(fc_w.T)
    fcb = jnp.zeros((1, c_pad), jnp.float32).at[:, :num_classes].set(fc_b[None, :])

    return {
        "wih_t": w_ih.T.astype(jnp.bfloat16),                 # (D, 4H)
        "whh_t": w_hh.T.astype(jnp.bfloat16),                 # (H, 4H)
        "b": b[None, :],                                      # (1, 4H) f32
        "fc1w_t": fc1_w.T.astype(jnp.bfloat16),               # (H, 128)
        "fc1b": fc1_b[None, :],                               # (1, 128) f32
        "fcw_t": fcw_t.astype(jnp.bfloat16),                  # (128, Cp)
        "fcb": fcb,                                           # (1, Cp) f32
        "num_classes": num_classes,
    }


def reference_forward(x_btd, params):
    """Pure-JAX reference matching PyTorch nn.LSTM semantics (same bf16 casts,
    same [i, f, o, g] packed column order)."""
    B, T, D = x_btd.shape
    H = params["whh_t"].shape[0]
    C = params["num_classes"]
    x_bf = jnp.transpose(x_btd, (1, 0, 2)).astype(jnp.bfloat16)   # (T, B, D)

    def cell(carry, x_t):
        h, c = carry
        gates = (jnp.dot(x_t, params["wih_t"], preferred_element_type=jnp.float32)
                 + jnp.dot(h.astype(jnp.bfloat16), params["whh_t"],
                           preferred_element_type=jnp.float32)
                 + params["b"])
        i = jax.nn.sigmoid(gates[:, 0 * H:1 * H])
        f = jax.nn.sigmoid(gates[:, 1 * H:2 * H])
        o = jax.nn.sigmoid(gates[:, 2 * H:3 * H])
        g = jnp.tanh(gates[:, 3 * H:4 * H])
        c = f * c + i * g
        h = o * jnp.tanh(c)
        return (h, c), None

    (h_T, _), _ = lax.scan(cell,
                           (jnp.zeros((B, H), jnp.float32),
                            jnp.zeros((B, H), jnp.float32)),
                           x_bf)
    z = jnp.maximum(h_T, 0.0)
    z = jnp.dot(z.astype(jnp.bfloat16), params["fc1w_t"],
                preferred_element_type=jnp.float32) + params["fc1b"]
    z = jnp.maximum(z, 0.0)
    z = jnp.dot(z.astype(jnp.bfloat16), params["fcw_t"],
                preferred_element_type=jnp.float32) + params["fcb"]
    return z[:, :C]


if __name__ == "__main__":
    B, T, D = 2, 8, 16          # batch, seq_length, input_size
    H, C = 128, 4               # hidden_size=128 per the module spec, num_classes

    key = jax.random.PRNGKey(0)
    k_x, k_p = jax.random.split(key)
    x = jax.random.normal(k_x, (B, T, D), jnp.float32)      # (B, T, D) batch_first
    params = init_params(k_p, D, H, C)

    fwd = functools.partial(lstm_model_forward, time_chunk=4, unroll=4)
    out = jax.block_until_ready(fwd(x, params))
    ref = jax.block_until_ready(reference_forward(x, params))

    assert out.shape == (B, C)
    np.testing.assert_allclose(np.asarray(out), np.asarray(ref),
                               rtol=1e-2, atol=1e-2)
    print("KERNEL_OK")
</pallas_src>

<mosaic_0001>
module attributes {stable_mosaic.version = 11 : i64} {
  func.func @lstm_fc_kernel(%arg0: i32, %arg1: i32, %arg2: memref<32x16xbf16, #tpu.memory_space<vmem>>, %arg3: memref<16x512xbf16, #tpu.memory_space<vmem>>, %arg4: memref<128x512xbf16, #tpu.memory_space<vmem>>, %arg5: memref<1x512xf32, #tpu.memory_space<vmem>>, %arg6: memref<128x128xbf16, #tpu.memory_space<vmem>>, %arg7: memref<1x128xf32, #tpu.memory_space<vmem>>, %arg8: memref<128x128xbf16, #tpu.memory_space<vmem>>, %arg9: memref<1x128xf32, #tpu.memory_space<vmem>>, %arg10: memref<8x128xf32, #tpu.memory_space<vmem>>, %arg11: memref<8x128xf32, #tpu.memory_space<vmem>>, %arg12: memref<8x128xf32, #tpu.memory_space<vmem>>, %arg13: memref<32x512xf32, #tpu.memory_space<vmem>>) attributes {dimension_semantics = [#tpu.dimension_semantics<parallel>, #tpu.dimension_semantics<arbitrary>], iteration_bounds = array<i64: 1, 2>, scalar_prefetch = 0 : i64, scratch_operands = 3 : i64, tpu.core_type = #tpu.core_type<tc>, window_params = [{transform_indices = @transform_0, window_bounds = array<i64: 32, 16>}, {pipeline_mode = #tpu.pipeline_mode<synchronous>, transform_indices = @transform_1, window_bounds = array<i64: 16, 512>}, {pipeline_mode = #tpu.pipeline_mode<synchronous>, transform_indices = @transform_2, window_bounds = array<i64: 128, 512>}, {pipeline_mode = #tpu.pipeline_mode<synchronous>, transform_indices = @transform_3, window_bounds = array<i64: 1, 512>}, {pipeline_mode = #tpu.pipeline_mode<synchronous>, transform_indices = @transform_4, window_bounds = array<i64: 128, 128>}, {pipeline_mode = #tpu.pipeline_mode<synchronous>, transform_indices = @transform_5, window_bounds = array<i64: 1, 128>}, {pipeline_mode = #tpu.pipeline_mode<synchronous>, transform_indices = @transform_6, window_bounds = array<i64: 128, 128>}, {pipeline_mode = #tpu.pipeline_mode<synchronous>, transform_indices = @transform_7, window_bounds = array<i64: 1, 128>}, {transform_indices = @transform_8, window_bounds = array<i64: 8, 128>}]} {
    %c0_i32 = arith.constant 0 : i32
    %0 = arith.cmpi eq, %arg1, %c0_i32 : i32
    %1 = arith.extui %0 : i1 to i32
    %c0_i32_0 = arith.constant 0 : i32
    %2 = arith.cmpi ne, %1, %c0_i32_0 : i32
    scf.if %2 {
      %cst_42 = arith.constant 0.000000e+00 : f32
      %113 = vector.broadcast %cst_42 : f32 to vector<8x128xf32>
      %c0_43 = arith.constant 0 : index
      %c0_44 = arith.constant 0 : index
      %114 = vector.load %arg11[%c0_43, %c0_44] : memref<8x128xf32, #tpu.memory_space<vmem>>, vector<8x128xf32>
      tpu.vector_store %arg11[%c0_43, %c0_44], %113 {strides = array<i32>} : memref<8x128xf32, #tpu.memory_space<vmem>>, vector<8x128xf32>,
      %cst_45 = arith.constant 0.000000e+00 : f32
      %115 = vector.broadcast %cst_45 : f32 to vector<8x128xf32>
      %c0_46 = arith.constant 0 : index
      %c0_47 = arith.constant 0 : index
      %116 = vector.load %arg12[%c0_46, %c0_47] : memref<8x128xf32, #tpu.memory_space<vmem>>, vector<8x128xf32>
      tpu.vector_store %arg12[%c0_46, %c0_47], %115 {strides = array<i32>} : memref<8x128xf32, #tpu.memory_space<vmem>>, vector<8x128xf32>,
    } else {
    }
    %c0 = arith.constant 0 : index
    %c0_1 = arith.constant 0 : index
    %3 = vector.load %arg2[%c0, %c0_1] : memref<32x16xbf16, #tpu.memory_space<vmem>>, vector<32x16xbf16>
    %c0_2 = arith.constant 0 : index
    %c0_3 = arith.constant 0 : index
    %4 = vector.load %arg3[%c0_2, %c0_3] : memref<16x512xbf16, #tpu.memory_space<vmem>>, vector<16x512xbf16>
    %cst = arith.constant dense<0.000000e+00> : vector<32x512xf32>
    %5 = tpu.matmul %3, %4, %cst {dimension_numbers = #tpu.dot_dimension_numbers<[1], [0], [0], [1], [0, 0, 1, 1], [], []>} : vector<32x16xbf16>, vector<16x512xbf16>, vector<32x512xf32> -> vector<32x512xf32>
    %c0_4 = arith.constant 0 : index
    %c0_5 = arith.constant 0 : index
    %6 = vector.load %arg5[%c0_4, %c0_5] : memref<1x512xf32, #tpu.memory_space<vmem>>, vector<1x512xf32>
    %7 = vector.broadcast %6 : vector<1x512xf32> to vector<32x512xf32>
    %8 = arith.addf %5, %7 : vector<32x512xf32>
    %c0_6 = arith.constant 0 : index
    %c0_7 = arith.constant 0 : index
    %9 = vector.load %arg13[%c0_6, %c0_7] : memref<32x512xf32, #tpu.memory_space<vmem>>, vector<32x512xf32>
    tpu.vector_store %arg13[%c0_6, %c0_7], %8 {strides = array<i32>} : memref<32x512xf32, #tpu.memory_space<vmem>>, vector<32x512xf32>,
    %c0_8 = arith.constant 0 : index
    %c0_9 = arith.constant 0 : index
    %10 = vector.load %arg11[%c0_8, %c0_9] : memref<8x128xf32, #tpu.memory_space<vmem>>, vector<8x128xf32>
    %c0_10 = arith.constant 0 : index
    %c0_11 = arith.constant 0 : index
    %11 = vector.load %arg12[%c0_10, %c0_11] : memref<8x128xf32, #tpu.memory_space<vmem>>, vector<8x128xf32>
    %c0_i32_12 = arith.constant 0 : i32
    %c8_i32 = arith.constant 8 : i32
    %12 = arith.muli %c0_i32_12, %c8_i32 : i32
    %13 = tpu.assume_multiple %12, 8 : i32
    %14 = arith.index_cast %13 : i32 to index
    %c0_13 = arith.constant 0 : index
    %15 = vector.load %arg13[%14, %c0_13] : memref<32x512xf32, #tpu.memory_space<vmem>>, vector<8x512xf32>
    %16 = arith.truncf %10 : vector<8x128xf32> to vector<8x128xbf16>
    %c0_14 = arith.constant 0 : index
    %c0_15 = arith.constant 0 : index
    %17 = vector.load %arg4[%c0_14, %c0_15] : memref<128x512xbf16, #tpu.memory_space<vmem>>, vector<128x512xbf16>
    %cst_16 = arith.constant dense<0.000000e+00> : vector<8x512xf32>
    %18 = tpu.matmul %16, %17, %cst_16 {dimension_numbers = #tpu.dot_dimension_numbers<[1], [0], [0], [1], [0, 0, 1, 1], [], []>} : vector<8x128xbf16>, vector<128x512xbf16>, vector<8x512xf32> -> vector<8x512xf32>
    %19 = arith.addf %15, %18 : vector<8x512xf32>
    %20 = vector.extract_strided_slice %19 {offsets = [0, 0], sizes = [8, 384], strides = [1, 1]} : vector<8x512xf32> to vector<8x384xf32>
    %21 = arith.negf %20 : vector<8x384xf32>
    %22 = math.exp %21 : vector<8x384xf32>
    %cst_17 = arith.constant 1.000000e+00 : f32
    %23 = vector.broadcast %cst_17 : f32 to vector<8x384xf32>
    %24 = arith.addf %23, %22 : vector<8x384xf32>
    %25 = arith.divf %23, %24 : vector<8x384xf32>
    %26 = vector.extract_strided_slice %19 {offsets = [0, 384], sizes = [8, 128], strides = [1, 1]} : vector<8x512xf32> to vector<8x128xf32>
    %27 = math.tanh %26 : vector<8x128xf32>
    %28 = vector.extract_strided_slice %25 {offsets = [0, 0], sizes = [8, 128], strides = [1, 1]} : vector<8x384xf32> to vector<8x128xf32>
    %29 = vector.extract_strided_slice %25 {offsets = [0, 128], sizes = [8, 128], strides = [1, 1]} : vector<8x384xf32> to vector<8x128xf32>
    %30 = vector.extract_strided_slice %25 {offsets = [0, 256], sizes = [8, 128], strides = [1, 1]} : vector<8x384xf32> to vector<8x128xf32>
    %31 = arith.mulf %29, %11 : vector<8x128xf32>
    %32 = arith.mulf %28, %27 : vector<8x128xf32>
    %33 = arith.addf %31, %32 : vector<8x128xf32>
    %34 = math.tanh %33 : vector<8x128xf32>
    %35 = arith.mulf %30, %34 : vector<8x128xf32>
    %c1_i32 = arith.constant 1 : i32
    %c8_i32_18 = arith.constant 8 : i32
    %36 = arith.muli %c1_i32, %c8_i32_18 : i32
    %37 = tpu.assume_multiple %36, 8 : i32
    %38 = arith.index_cast %37 : i32 to index
    %c0_19 = arith.constant 0 : index
    %39 = vector.load %arg13[%38, %c0_19] : memref<32x512xf32, #tpu.memory_space<vmem>>, vector<8x512xf32>
    %40 = arith.truncf %35 : vector<8x128xf32> to vector<8x128xbf16>
    %c0_20 = arith.constant 0 : index
    %c0_21 = arith.constant 0 : index
    %41 = vector.load %arg4[%c0_20, %c0_21] : memref<128x512xbf16, #tpu.memory_space<vmem>>, vector<128x512xbf16>
    %cst_22 = arith.constant dense<0.000000e+00> : vector<8x512xf32>
    %42 = tpu.matmul %40, %41, %cst_22 {dimension_numbers = #tpu.dot_dimension_numbers<[1], [0], [0], [1], [0, 0, 1, 1], [], []>} : vector<8x128xbf16>, vector<128x512xbf16>, vector<8x512xf32> -> vector<8x512xf32>
    %43 = arith.addf %39, %42 : vector<8x512xf32>
    %44 = vector.extract_strided_slice %43 {offsets = [0, 0], sizes = [8, 384], strides = [1, 1]} : vector<8x512xf32> to vector<8x384xf32>
    %45 = arith.negf %44 : vector<8x384xf32>
    %46 = math.exp %45 : vector<8x384xf32>
    %cst_23 = arith.constant 1.000000e+00 : f32
    %47 = vector.broadcast %cst_23 : f32 to vector<8x384xf32>
    %48 = arith.addf %47, %46 : vector<8x384xf32>
    %49 = arith.divf %47, %48 : vector<8x384xf32>
    %50 = vector.extract_strided_slice %43 {offsets = [0, 384], sizes = [8, 128], strides = [1, 1]} : vector<8x512xf32> to vector<8x128xf32>
    %51 = math.tanh %50 : vector<8x128xf32>
    %52 = vector.extract_strided_slice %49 {offsets = [0, 0], sizes = [8, 128], strides = [1, 1]} : vector<8x384xf32> to vector<8x128xf32>
    %53 = vector.extract_strided_slice %49 {offsets = [0, 128], sizes = [8, 128], strides = [1, 1]} : vector<8x384xf32> to vector<8x128xf32>
    %54 = vector.extract_strided_slice %49 {offsets = [0, 256], sizes = [8, 128], strides = [1, 1]} : vector<8x384xf32> to vector<8x128xf32>
    %55 = arith.mulf %53, %33 : vector<8x128xf32>
    %56 = arith.mulf %52, %51 : vector<8x128xf32>
    %57 = arith.addf %55, %56 : vector<8x128xf32>
    %58 = math.tanh %57 : vector<8x128xf32>
    %59 = arith.mulf %54, %58 : vector<8x128xf32>
    %c2_i32 = arith.constant 2 : i32
    %c8_i32_24 = arith.constant 8 : i32
    %60 = arith.muli %c2_i32, %c8_i32_24 : i32
    %61 = tpu.assume_multiple %60, 8 : i32
    %62 = arith.index_cast %61 : i32 to index
    %c0_25 = arith.constant 0 : index
    %63 = vector.load %arg13[%62, %c0_25] : memref<32x512xf32, #tpu.memory_space<vmem>>, vector<8x512xf32>
    %64 = arith.truncf %59 : vector<8x128xf32> to vector<8x128xbf16>
    %c0_26 = arith.constant 0 : index
    %c0_27 = arith.constant 0 : index
    %65 = vector.load %arg4[%c0_26, %c0_27] : memref<128x512xbf16, #tpu.memory_space<vmem>>, vector<128x512xbf16>
    %cst_28 = arith.constant dense<0.000000e+00> : vector<8x512xf32>
    %66 = tpu.matmul %64, %65, %cst_28 {dimension_numbers = #tpu.dot_dimension_numbers<[1], [0], [0], [1], [0, 0, 1, 1], [], []>} : vector<8x128xbf16>, vector<128x512xbf16>, vector<8x512xf32> -> vector<8x512xf32>
    %67 = arith.addf %63, %66 : vector<8x512xf32>
    %68 = vector.extract_strided_slice %67 {offsets = [0, 0], sizes = [8, 384], strides = [1, 1]} : vector<8x512xf32> to vector<8x384xf32>
    %69 = arith.negf %68 : vector<8x384xf32>
    %70 = math.exp %69 : vector<8x384xf32>
    %cst_29 = arith.constant 1.000000e+00 : f32
    %71 = vector.broadcast %cst_29 : f32 to vector<8x384xf32>
    %72 = arith.addf %71, %70 : vector<8x384xf32>
    %73 = arith.divf %71, %72 : vector<8x384xf32>
    %74 = vector.extract_strided_slice %67 {offsets = [0, 384], sizes = [8, 128], strides = [1, 1]} : vector<8x512xf32> to vector<8x128xf32>
    %75 = math.tanh %74 : vector<8x128xf32>
    %76 = vector.extract_strided_slice %73 {offsets = [0, 0], sizes = [8, 128], strides = [1, 1]} : vector<8x384xf32> to vector<8x128xf32>
    %77 = vector.extract_strided_slice %73 {offsets = [0, 128], sizes = [8, 128], strides = [1, 1]} : vector<8x384xf32> to vector<8x128xf32>
    %78 = vector.extract_strided_slice %73 {offsets = [0, 256], sizes = [8, 128], strides = [1, 1]} : vector<8x384xf32> to vector<8x128xf32>
    %79 = arith.mulf %77, %57 : vector<8x128xf32>
    %80 = arith.mulf %76, %75 : vector<8x128xf32>
    %81 = arith.addf %79, %80 : vector<8x128xf32>
    %82 = math.tanh %81 : vector<8x128xf32>
    %83 = arith.mulf %78, %82 : vector<8x128xf32>
    %c3_i32 = arith.constant 3 : i32
    %c8_i32_30 = arith.constant 8 : i32
    %84 = arith.muli %c3_i32, %c8_i32_30 : i32
    %85 = tpu.assume_multiple %84, 8 : i32
    %86 = arith.index_cast %85 : i32 to index
    %c0_31 = arith.constant 0 : index
    %87 = vector.load %arg13[%86, %c0_31] : memref<32x512xf32, #tpu.memory_space<vmem>>, vector<8x512xf32>
    %88 = arith.truncf %83 : vector<8x128xf32> to vector<8x128xbf16>
    %c0_32 = arith.constant 0 : index
    %c0_33 = arith.constant 0 : index
    %89 = vector.load %arg4[%c0_32, %c0_33] : memref<128x512xbf16, #tpu.memory_space<vmem>>, vector<128x512xbf16>
    %cst_34 = arith.constant dense<0.000000e+00> : vector<8x512xf32>
    %90 = tpu.matmul %88, %89, %cst_34 {dimension_numbers = #tpu.dot_dimension_numbers<[1], [0], [0], [1], [0, 0, 1, 1], [], []>} : vector<8x128xbf16>, vector<128x512xbf16>, vector<8x512xf32> -> vector<8x512xf32>
    %91 = arith.addf %87, %90 : vector<8x512xf32>
    %92 = vector.extract_strided_slice %91 {offsets = [0, 0], sizes = [8, 384], strides = [1, 1]} : vector<8x512xf32> to vector<8x384xf32>
    %93 = arith.negf %92 : vector<8x384xf32>
    %94 = math.exp %93 : vector<8x384xf32>
    %cst_35 = arith.constant 1.000000e+00 : f32
    %95 = vector.broadcast %cst_35 : f32 to vector<8x384xf32>
    %96 = arith.addf %95, %94 : vector<8x384xf32>
    %97 = arith.divf %95, %96 : vector<8x384xf32>
    %98 = vector.extract_strided_slice %91 {offsets = [0, 384], sizes = [8, 128], strides = [1, 1]} : vector<8x512xf32> to vector<8x128xf32>
    %99 = math.tanh %98 : vector<8x128xf32>
    %100 = vector.extract_strided_slice %97 {offsets = [0, 0], sizes = [8, 128], strides = [1, 1]} : vector<8x384xf32> to vector<8x128xf32>
    %101 = vector.extract_strided_slice %97 {offsets = [0, 128], sizes = [8, 128], strides = [1, 1]} : vector<8x384xf32> to vector<8x128xf32>
    %102 = vector.extract_strided_slice %97 {offsets = [0, 256], sizes = [8, 128], strides = [1, 1]} : vector<8x384xf32> to vector<8x128xf32>
    %103 = arith.mulf %101, %81 : vector<8x128xf32>
    %104 = arith.mulf %100, %99 : vector<8x128xf32>
    %105 = arith.addf %103, %104 : vector<8x128xf32>
    %106 = math.tanh %105 : vector<8x128xf32>
    %107 = arith.mulf %102, %106 : vector<8x128xf32>
    %c4_i32 = arith.constant 4 : i32
    %c0_36 = arith.constant 0 : index
    %c0_37 = arith.constant 0 : index
    %108 = vector.load %arg11[%c0_36, %c0_37] : memref<8x128xf32, #tpu.memory_space<vmem>>, vector<8x128xf32>
    tpu.vector_store %arg11[%c0_36, %c0_37], %107 {strides = array<i32>} : memref<8x128xf32, #tpu.memory_space<vmem>>, vector<8x128xf32>,
    %c0_38 = arith.constant 0 : index
    %c0_39 = arith.constant 0 : index
    %109 = vector.load %arg12[%c0_38, %c0_39] : memref<8x128xf32, #tpu.memory_space<vmem>>, vector<8x128xf32>
    tpu.vector_store %arg12[%c0_38, %c0_39], %105 {strides = array<i32>} : memref<8x128xf32, #tpu.memory_space<vmem>>, vector<8x128xf32>,
    %c1_i32_40 = arith.constant 1 : i32
    %110 = arith.cmpi eq, %arg1, %c1_i32_40 : i32
    %111 = arith.extui %110 : i1 to i32
    %c0_i32_41 = arith.constant 0 : i32
    %112 = arith.cmpi ne, %111, %c0_i32_41 : i32
    scf.if %112 {
      %cst_42 = arith.constant 0.000000e+00 : f32
      %113 = vector.broadcast %cst_42 : f32 to vector<8x128xf32>
      %114 = arith.maximumf %107, %113 : vector<8x128xf32>
      %115 = arith.truncf %114 : vector<8x128xf32> to vector<8x128xbf16>
      %c0_43 = arith.constant 0 : index
      %c0_44 = arith.constant 0 : index
      %116 = vector.load %arg6[%c0_43, %c0_44] : memref<128x128xbf16, #tpu.memory_space<vmem>>, vector<128x128xbf16>
      %cst_45 = arith.constant dense<0.000000e+00> : vector<8x128xf32>
      %117 = tpu.matmul %115, %116, %cst_45 {dimension_numbers = #tpu.dot_dimension_numbers<[1], [0], [0], [1], [0, 0, 1, 1], [], []>} : vector<8x128xbf16>, vector<128x128xbf16>, vector<8x128xf32> -> vector<8x128xf32>
      %c0_46 = arith.constant 0 : index
      %c0_47 = arith.constant 0 : index
      %118 = vector.load %arg7[%c0_46, %c0_47] : memref<1x128xf32, #tpu.memory_space<vmem>>, vector<1x128xf32>
      %119 = vector.broadcast %118 : vector<1x128xf32> to vector<8x128xf32>
      %120 = arith.addf %117, %119 : vector<8x128xf32>
      %cst_48 = arith.constant 0.000000e+00 : f32
      %121 = vector.broadcast %cst_48 : f32 to vector<8x128xf32>
      %122 = arith.maximumf %120, %121 : vector<8x128xf32>
      %123 = arith.truncf %122 : vector<8x128xf32> to vector<8x128xbf16>
      %c0_49 = arith.constant 0 : index
      %c0_50 = arith.constant 0 : index
      %124 = vector.load %arg8[%c0_49, %c0_50] : memref<128x128xbf16, #tpu.memory_space<vmem>>, vector<128x128xbf16>
      %cst_51 = arith.constant dense<0.000000e+00> : vector<8x128xf32>
      %125 = tpu.matmul %123, %124, %cst_51 {dimension_numbers = #tpu.dot_dimension_numbers<[1], [0], [0], [1], [0, 0, 1, 1], [], []>} : vector<8x128xbf16>, vector<128x128xbf16>, vector<8x128xf32> -> vector<8x128xf32>
      %c0_52 = arith.constant 0 : index
      %c0_53 = arith.constant 0 : index
      %126 = vector.load %arg9[%c0_52, %c0_53] : memref<1x128xf32, #tpu.memory_space<vmem>>, vector<1x128xf32>
      %127 = vector.broadcast %126 : vector<1x128xf32> to vector<8x128xf32>
      %128 = arith.addf %125, %127 : vector<8x128xf32>
      %c0_54 = arith.constant 0 : index
      %c0_55 = arith.constant 0 : index
      %129 = vector.load %arg10[%c0_54, %c0_55] : memref<8x128xf32, #tpu.memory_space<vmem>>, vector<8x128xf32>
      tpu.vector_store %arg10[%c0_54, %c0_55], %128 {strides = array<i32>} : memref<8x128xf32, #tpu.memory_space<vmem>>, vector<8x128xf32>,
    } else {
    }
    return
  }
  func.func @transform_0(%arg0: i32, %arg1: i32) -> (i32, i32) {
    %c2_i32 = arith.constant 2 : i32
    %0 = arith.muli %arg0, %c2_i32 : i32
    %1 = arith.addi %0, %arg1 : i32
    %c0_i32 = arith.constant 0 : i32
    %c0_i32_0 = arith.constant 0 : i32
    return %1, %c0_i32 : i32, i32
  }
  func.func @transform_1(%arg0: i32, %arg1: i32) -> (i32, i32) {
    %c0_i32 = arith.constant 0 : i32
    %c0_i32_0 = arith.constant 0 : i32
    %c0_i32_1 = arith.constant 0 : i32
    return %c0_i32, %c0_i32_0 : i32, i32
  }
  func.func @transform_2(%arg0: i32, %arg1: i32) -> (i32, i32) {
    %c0_i32 = arith.constant 0 : i32
    %c0_i32_0 = arith.constant 0 : i32
    %c0_i32_1 = arith.constant 0 : i32
    return %c0_i32, %c0_i32_0 : i32, i32
  }
  func.func @transform_3(%arg0: i32, %arg1: i32) -> (i32, i32) {
    %c0_i32 = arith.constant 0 : i32
    %c0_i32_0 = arith.constant 0 : i32
    %c0_i32_1 = arith.constant 0 : i32
    return %c0_i32, %c0_i32_0 : i32, i32
  }
  func.func @transform_4(%arg0: i32, %arg1: i32) -> (i32, i32) {
    %c0_i32 = arith.constant 0 : i32
    %c0_i32_0 = arith.constant 0 : i32
    %c0_i32_1 = arith.constant 0 : i32
    return %c0_i32, %c0_i32_0 : i32, i32
  }
  func.func @transform_5(%arg0: i32, %arg1: i32) -> (i32, i32) {
    %c0_i32 = arith.constant 0 : i32
    %c0_i32_0 = arith.constant 0 : i32
    %c0_i32_1 = arith.constant 0 : i32
    return %c0_i32, %c0_i32_0 : i32, i32
  }
  func.func @transform_6(%arg0: i32, %arg1: i32) -> (i32, i32) {
    %c0_i32 = arith.constant 0 : i32
    %c0_i32_0 = arith.constant 0 : i32
    %c0_i32_1 = arith.constant 0 : i32
    return %c0_i32, %c0_i32_0 : i32, i32
  }
  func.func @transform_7(%arg0: i32, %arg1: i32) -> (i32, i32) {
    %c0_i32 = arith.constant 0 : i32
    %c0_i32_0 = arith.constant 0 : i32
    %c0_i32_1 = arith.constant 0 : i32
    return %c0_i32, %c0_i32_0 : i32, i32
  }
  func.func @transform_8(%arg0: i32, %arg1: i32) -> (i32, i32) {
    %c0_i32 = arith.constant 0 : i32
    %c0_i32_0 = arith.constant 0 : i32
    return %arg0, %c0_i32 : i32, i32
  }
}

</mosaic_0001>

<llo_original>
// kernel: tpu_custom_call.1
$region0: #{tpu_custom_call.1}
  #allocation0 [shape = 'u32[]', space=smem, size = 0x4, offset = 0x4, fixed_abs, tag = 'smem constant byte address 0x4 - core index']
  #allocation1 [shape = 'u32[144,128]{1,0:T(1,128)}', space=vmem, size = 0x12000, scoped, tag = 'internal scratch']
  #allocation2 [shape = 'f32[8,128]{1,0:T(8,128)}', space=vmem, size = 0x1000, scoped, tag = 'scratch operand']
  #allocation3 [shape = 'f32[8,128]{1,0:T(8,128)}', space=vmem, size = 0x1000, scoped, tag = 'scratch operand']
  #allocation4 [shape = 'f32[32,512]{1,0:T(8,128)}', space=vmem, size = 0x10000, scoped, tag = 'scratch operand']
  %s0 = inlined_call_operand.vmem [shape: bf16[64,16], index: 0, kind: input, shape index: {}]
  %s1 = inlined_call_operand.vmem [shape: bf16[16,512], index: 1, kind: input, shape index: {}]
  %s2 = inlined_call_operand.hbm [shape: bf16[128,512], index: 2, kind: input, shape index: {}]
  %s3 = inlined_call_operand.vmem [shape: f32[1,512], index: 3, kind: input, shape index: {}]
  %s4 = inlined_call_operand.hbm [shape: bf16[128,128], index: 4, kind: input, shape index: {}]
  %s5 = inlined_call_operand.vmem [shape: f32[1,128], index: 5, kind: input, shape index: {}]
  %s6 = inlined_call_operand.hbm [shape: bf16[128,128], index: 6, kind: input, shape index: {}]
  %s7 = inlined_call_operand.vmem [shape: f32[1,128], index: 7, kind: input, shape index: {}]
  %s8 = inlined_call_operand.hbm [shape: f32[8,128], index: 8, kind: output, shape index: {}]
  %s9 = sld [smem:[#allocation0]]
  $region85: #{tpu_custom_call.1} parent=0
    _
  %s11 = ssub.s32 1, %s9
  %s12 = scalar_select 0, %s11, %s9
  $region1: #{tpu_custom_call.1} parent=0
    #allocation5 [shape = 'u8[131072]{0}', space=vmem, size = 0x20000, scoped, tag = 'input window, operand 2, single buffered']
    #allocation6 [shape = 's32[2]{0}', space=sflag, size = 0x8, scoped, tag = 'scoped memory for tpu_custom_call.1']
    #allocation7 [shape = 's32[2]{0}', space=sflag, size = 0x8, scoped, tag = 'scoped memory for tpu_custom_call.1']
    #allocation8 [shape = 'u8[32768]{0}', space=vmem, size = 0x8000, scoped, tag = 'input window, operand 4, single buffered']
    #allocation9 [shape = 's32[1]{0}', space=sflag, size = 0x4, scoped, tag = 'scoped memory for tpu_custom_call.1']
    #allocation10 [shape = 'u8[32768]{0}', space=vmem, size = 0x8000, scoped, tag = 'input window, operand 6, single buffered']
    #allocation11 [shape = 'u8[4096]{0}', space=vmem, size = 0x1000, scoped, tag = 'output window, operand 0, single buffered']
    %13 = vsyncpa [#allocation6], 0
    %14 = vsyncpa [#allocation9], 0
    %15 = vsyncpa [#allocation7], 0
    loop: start=0, step=1, limit=4
    $region2: #{tpu_custom_call.1} parent=1 // loop_pre_header
      _
    $region3: #{tpu_custom_call.1} parent=1 // loop_header
      %s17 = sphi 0, %s21
      %p18 = scmp.ge.s32.totalorder %s17, 4
      %s24 = sphi 0, %s36
      %s25 = sphi 0, %s32
      %s26 = sphi 0, %s24
      %s27 = sphi 0, %s25
      %s28 = sphi 0, %s26
      %s29 = sphi 0, %s27
      %s43 = sphi 0, %s45
      %s46 = sphi 0, %s43
      %s47 = sphi 0, %s46
      %s63 = sphi 0, %s47
      %s67 = sphi 0, %s67
      %s69 = sphi 0, %s67
      %s70 = sphi 0, %s69
      %s84 = sphi 0, %s70
      %s88 = sphi 0, %s88
      %s90 = sphi 0, %s88
      %s91 = sphi 0, %s90
      %s105 = sphi 0, %s91
      %s109 = sphi 0, %s109
      %s111 = sphi 0, %s109
      %s112 = sphi 0, %s111
      %s126 = sphi 0, %s112
      %s130 = sphi 0, %s130
      %s132 = sphi 0, %s130
      %s133 = sphi 0, %s132
      %s147 = sphi 0, %s133
      %s151 = sphi 0, %s151
      %s153 = sphi 0, %s151
      %s154 = sphi 0, %s153
      %s168 = sphi 0, %s154
      %s172 = sphi 0, %s172
      %s174 = sphi 0, %s172
      %s175 = sphi 0, %s174
      %s189 = sphi 0, %s175
      %s193 = sphi 0, %s193
      %s195 = sphi 0, %s193
      %s196 = sphi 0, %s195
      %s210 = sphi 0, %s196
      %s216 = sphi 0, %s218
      %s219 = sphi 0, %s216
      %s220 = sphi 0, %s219
      %s236 = sphi 0, %s220
    $region4: #{tpu_custom_call.1} parent=1 // loop_header_branch
      %20 = sbr.rel (%p18) target = $region8
    $region5: #{tpu_custom_call.1} parent=1 // loop_body
      %s22 = ssub.s32 %s17, 1
      %s23 = ssub.s32 %s17, 2
      %s30 = sadd.s32 1, %s25
      %p31 = scmp.ge.s32.totalorder %s30, 2
      %s32 = scalar_select %p31, 0, %s30
      %s33 = sadd.s32 1, %s24
      %s34 = scalar_select %p31, %s33, %s24
      %p35 = scmp.ge.s32.totalorder %s34, 1
      %s36 = scalar_select %p35, 0, %s34
      %s37 = smul.u32 %s24, 2
      %s38 = sadd.s32 %s37, %s25
      %s39 = smul.u32 %s36, 2
      %s40 = sadd.s32 %s39, %s32
      %s41 = ssub.s32 %s38, %s40
      %p42 = scmp.eq.s32.totalorder %s41, 0
      %s44 = sadd.s32 %s43, 1
      %s45 = scalar_select %p42, %s43, %s44
      %p48 = pneg %p42
      %p49 = scmp.eq.s32.totalorder %s17, 1
      %p50 = por %p48, %p49
      %p51 = scmp.ne.s32.totalorder %s43, %s46
      %p52 = scmp.eq.s32.totalorder %s17, 0
      %p53 = por %p51, %p52
      %p54 = scmp.ne.s32.totalorder %s43, %s46
      %p55 = scmp.eq.s32.totalorder %s22, 1
      %p56 = por %p54, %p55
      %p57 = scmp.ne.s32.totalorder %s46, %s47
      %p58 = scmp.eq.s32.totalorder %s22, 0
      %p59 = por %p57, %p58
      %p60 = scmp.ne.s32.totalorder %s46, %s47
      %p61 = scmp.eq.s32.totalorder %s23, 1
      %p62 = por %p60, %p61
      %p64 = scmp.ne.s32.totalorder %s47, %s63
      %p65 = scmp.eq.s32.totalorder %s23, 0
      %p66 = por %p64, %p65
      %s68 = sadd.s32 %s67, 1
      %p71 = scmp.eq.s32.totalorder %s17, 1
      %p72 = scmp.ne.s32.totalorder %s67, %s69
      %p73 = scmp.eq.s32.totalorder %s17, 0
      %p74 = por %p72, %p73
      %p75 = scmp.ne.s32.totalorder %s67, %s69
      %p76 = scmp.eq.s32.totalorder %s22, 1
      %p77 = por %p75, %p76
      %p78 = scmp.ne.s32.totalorder %s69, %s70
      %p79 = scmp.eq.s32.totalorder %s22, 0
      %p80 = por %p78, %p79
      %p81 = scmp.ne.s32.totalorder %s69, %s70
      %p82 = scmp.eq.s32.totalorder %s23, 1
      %p83 = por %p81, %p82
      %p85 = scmp.ne.s32.totalorder %s70, %s84
      %p86 = scmp.eq.s32.totalorder %s23, 0
      %p87 = por %p85, %p86
      %s89 = sadd.s32 %s88, 1
      %p92 = scmp.eq.s32.totalorder %s17, 1
      %p93 = scmp.ne.s32.totalorder %s88, %s90
      %p94 = scmp.eq.s32.totalorder %s17, 0
      %p95 = por %p93, %p94
      %p96 = scmp.ne.s32.totalorder %s88, %s90
      %p97 = scmp.eq.s32.totalorder %s22, 1
      %p98 = por %p96, %p97
      %p99 = scmp.ne.s32.totalorder %s90, %s91
      %p100 = scmp.eq.s32.totalorder %s22, 0
      %p101 = por %p99, %p100
      %p102 = scmp.ne.s32.totalorder %s90, %s91
      %p103 = scmp.eq.s32.totalorder %s23, 1
      %p104 = por %p102, %p103
      %p106 = scmp.ne.s32.totalorder %s91, %s105
      %p107 = scmp.eq.s32.totalorder %s23, 0
      %p108 = por %p106, %p107
      %s110 = sadd.s32 %s109, 1
      %p113 = scmp.eq.s32.totalorder %s17, 1
      %p114 = scmp.ne.s32.totalorder %s109, %s111
      %p115 = scmp.eq.s32.totalorder %s17, 0
      %p116 = por %p114, %p115
      %p117 = scmp.ne.s32.totalorder %s109, %s111
      %p118 = scmp.eq.s32.totalorder %s22, 1
      %p119 = por %p117, %p118
      %p120 = scmp.ne.s32.totalorder %s111, %s112
      %p121 = scmp.eq.s32.totalorder %s22, 0
      %p122 = por %p120, %p121
      %p123 = scmp.ne.s32.totalorder %s111, %s112
      %p124 = scmp.eq.s32.totalorder %s23, 1
      %p125 = por %p123, %p124
      %p127 = scmp.ne.s32.totalorder %s112, %s126
      %p128 = scmp.eq.s32.totalorder %s23, 0
      %p129 = por %p127, %p128
      %s131 = sadd.s32 %s130, 1
      %p134 = scmp.eq.s32.totalorder %s17, 1
      %p135 = scmp.ne.s32.totalorder %s130, %s132
      %p136 = scmp.eq.s32.totalorder %s17, 0
      %p137 = por %p135, %p136
      %p138 = scmp.ne.s32.totalorder %s130, %s132
      %p139 = scmp.eq.s32.totalorder %s22, 1
      %p140 = por %p138, %p139
      %p141 = scmp.ne.s32.totalorder %s132, %s133
      %p142 = scmp.eq.s32.totalorder %s22, 0
      %p143 = por %p141, %p142
      %p144 = scmp.ne.s32.totalorder %s132, %s133
      %p145 = scmp.eq.s32.totalorder %s23, 1
      %p146 = por %p144, %p145
      %p148 = scmp.ne.s32.totalorder %s133, %s147
      %p149 = scmp.eq.s32.totalorder %s23, 0
      %p150 = por %p148, %p149
      %s152 = sadd.s32 %s151, 1
      %p155 = scmp.eq.s32.totalorder %s17, 1
      %p156 = scmp.ne.s32.totalorder %s151, %s153
      %p157 = scmp.eq.s32.totalorder %s17, 0
      %p158 = por %p156, %p157
      %p159 = scmp.ne.s32.totalorder %s151, %s153
      %p160 = scmp.eq.s32.totalorder %s22, 1
      %p161 = por %p159, %p160
      %p162 = scmp.ne.s32.totalorder %s153, %s154
      %p163 = scmp.eq.s32.totalorder %s22, 0
      %p164 = por %p162, %p163
      %p165 = scmp.ne.s32.totalorder %s153, %s154
      %p166 = scmp.eq.s32.totalorder %s23, 1
      %p167 = por %p165, %p166
      %p169 = scmp.ne.s32.totalorder %s154, %s168
      %p170 = scmp.eq.s32.totalorder %s23, 0
      %p171 = por %p169, %p170
      %s173 = sadd.s32 %s172, 1
      %p176 = scmp.eq.s32.totalorder %s17, 1
      %p177 = scmp.ne.s32.totalorder %s172, %s174
      %p178 = scmp.eq.s32.totalorder %s17, 0
      %p179 = por %p177, %p178
      %p180 = scmp.ne.s32.totalorder %s172, %s174
      %p181 = scmp.eq.s32.totalorder %s22, 1
      %p182 = por %p180, %p181
      %p183 = scmp.ne.s32.totalorder %s174, %s175
      %p184 = scmp.eq.s32.totalorder %s22, 0
      %p185 = por %p183, %p184
      %p186 = scmp.ne.s32.totalorder %s174, %s175
      %p187 = scmp.eq.s32.totalorder %s23, 1
      %p188 = por %p186, %p187
      %p190 = scmp.ne.s32.totalorder %s175, %s189
      %p191 = scmp.eq.s32.totalorder %s23, 0
      %p192 = por %p190, %p191
      %s194 = sadd.s32 %s193, 1
      %p197 = scmp.eq.s32.totalorder %s17, 1
      %p198 = scmp.ne.s32.totalorder %s193, %s195
      %p199 = scmp.eq.s32.totalorder %s17, 0
      %p200 = por %p198, %p199
      %p201 = scmp.ne.s32.totalorder %s193, %s195
      %p202 = scmp.eq.s32.totalorder %s22, 1
      %p203 = por %p201, %p202
      %p204 = scmp.ne.s32.totalorder %s195, %s196
      %p205 = scmp.eq.s32.totalorder %s22, 0
      %p206 = por %p204, %p205
      %p207 = scmp.ne.s32.totalorder %s195, %s196
      %p208 = scmp.eq.s32.totalorder %s23, 1
      %p209 = por %p207, %p208
      %p211 = scmp.ne.s32.totalorder %s196, %s210
      %p212 = scmp.eq.s32.totalorder %s23, 0
      %p213 = por %p211, %p212
      %s214 = ssub.s32 %s24, %s36
      %p215 = scmp.eq.s32.totalorder %s214, 0
      %s217 = sadd.s32 %s216, 1
      %s218 = scalar_select %p215, %s216, %s217
      %p221 = pneg %p215
      %p222 = scmp.eq.s32.totalorder %s17, 1
      %p223 = por %p221, %p222
      %p224 = scmp.ne.s32.totalorder %s216, %s219
      %p225 = scmp.eq.s32.totalorder %s17, 0
      %p226 = por %p224, %p225
      %p227 = scmp.ne.s32.totalorder %s216, %s219
      %p228 = scmp.eq.s32.totalorder %s22, 1
      %p229 = por %p227, %p228
      %p230 = scmp.ne.s32.totalorder %s219, %s220
      %p231 = scmp.eq.s32.totalorder %s22, 0
      %p232 = por %p230, %p231
      %p233 = scmp.ne.s32.totalorder %s219, %s220
      %p234 = scmp.eq.s32.totalorder %s23, 1
      %p235 = por %p233, %p234
      %p237 = scmp.ne.s32.totalorder %s220, %s236
      %p238 = scmp.eq.s32.totalorder %s23, 0
      %p239 = por %p237, %p238
      %p240 = scmp.le.s32.totalorder 1, %s17
      %p241 = scmp.lt.s32.totalorder %s17, 3
      %p242 = pnand %p240, %p241
      %p243 = pneg %p242
      // Predicated region
      $region9: #{tpu_custom_call.1} parent=5 // pred_check
        _
      $region10: #{tpu_custom_call.1} parent=5 // pred_check_branch
        %245 = sbr.rel (%p242) target = $region12
      $region11: #{tpu_custom_call.1} parent=5 // pred_region
        %s246 = ssub.s32 %s17, 1
        // Predicated region
        $region13: #{tpu_custom_call.1} parent=11 // pred_check
          %p247 = pneg %p80
        $region14: #{tpu_custom_call.1} parent=11 // pred_check_branch
          %249 = sbr.rel (%p247) target = $region16
        $region15: #{tpu_custom_call.1} parent=11 // pred_region
          _
        $region16: #{tpu_custom_call.1} parent=11 // pred_fallthru
          _
        // Predicated region
        $region17: #{tpu_custom_call.1} parent=11 // pred_check
          %p250 = pneg %p101
        $region18: #{tpu_custom_call.1} parent=11 // pred_check_branch
          %252 = sbr.rel (%p250) target = $region20
        $region19: #{tpu_custom_call.1} parent=11 // pred_region
          %s254 = ssub.s32 4096, 4096
          %255 = vsyncadd [#allocation6], %s254
          %s256 = sshll.u32 [#allocation5], 4
          %s257 = int_to_ptr.vmem [resolvable:$true] %s256
          %262 = dma.hbm_to_vmem [thread:$0]  %s2, 4096, %s257, [#allocation6], 256, 256, 16
        $region20: #{tpu_custom_call.1} parent=11 // pred_fallthru
          _
        // Predicated region
        $region21: #{tpu_custom_call.1} parent=11 // pred_check
          %p263 = pneg %p122
        $region22: #{tpu_custom_call.1} parent=11 // pred_check_branch
          %265 = sbr.rel (%p263) target = $region24
        $region23: #{tpu_custom_call.1} parent=11 // pred_region
          _
        $region24: #{tpu_custom_call.1} parent=11 // pred_fallthru
          _
        // Predicated region
        $region25: #{tpu_custom_call.1} parent=11 // pred_check
          %p266 = pneg %p143
        $region26: #{tpu_custom_call.1} parent=11 // pred_check_branch
          %268 = sbr.rel (%p266) target = $region28
        $region27: #{tpu_custom_call.1} parent=11 // pred_region
          %s270 = ssub.s32 1024, 1024
          %271 = vsyncadd [#allocation9], %s270
          %s272 = sshll.u32 [#allocation8], 4
          %s273 = int_to_ptr.vmem [resolvable:$true] %s272
          %278 = dma.hbm_to_vmem [thread:$0]  %s4, 1024, %s273, [#allocation9], 64, 64, 4
        $region28: #{tpu_custom_call.1} parent=11 // pred_fallthru
          _
        // Predicated region
        $region29: #{tpu_custom_call.1} parent=11 // pred_check
          %p279 = pneg %p164
        $region30: #{tpu_custom_call.1} parent=11 // pred_check_branch
          %281 = sbr.rel (%p279) target = $region32
        $region31: #{tpu_custom_call.1} parent=11 // pred_region
          _
        $region32: #{tpu_custom_call.1} parent=11 // pred_fallthru
          _
        // Predicated region
        $region33: #{tpu_custom_call.1} parent=11 // pred_check
          %p282 = pneg %p185
        $region34: #{tpu_custom_call.1} parent=11 // pred_check_branch
          %284 = sbr.rel (%p282) target = $region36
        $region35: #{tpu_custom_call.1} parent=11 // pred_region
          %s286 = ssub.s32 1024, 1024
          %287 = vsyncadd [#allocation9], %s286
          %s288 = sshll.u32 [#allocation10], 4
          %s289 = int_to_ptr.vmem [resolvable:$true] %s288
          %294 = dma.hbm_to_vmem [thread:$0]  %s6, 1024, %s289, [#allocation9], 64, 64, 4
        $region36: #{tpu_custom_call.1} parent=11 // pred_fallthru
          _
        // Predicated region
        $region37: #{tpu_custom_call.1} parent=11 // pred_check
          %p295 = pneg %p206
        $region38: #{tpu_custom_call.1} parent=11 // pred_check_branch
          %297 = sbr.rel (%p295) target = $region40
        $region39: #{tpu_custom_call.1} parent=11 // pred_region
          _
        $region40: #{tpu_custom_call.1} parent=11 // pred_fallthru
          _
      $region12: #{tpu_custom_call.1} parent=5 // pred_fallthru
        _
      %p298 = scmp.lt.s32.totalorder %s17, 2
      // Predicated region
      $region41: #{tpu_custom_call.1} parent=5 // pred_check
        %p299 = pneg %p298
      $region42: #{tpu_custom_call.1} parent=5 // pred_check_branch
        %301 = sbr.rel (%p299) target = $region44
      $region43: #{tpu_custom_call.1} parent=5 // pred_region
        // Predicated region
        $region45: #{tpu_custom_call.1} parent=43 // pred_check
          %p302 = pneg %p53
        $region46: #{tpu_custom_call.1} parent=43 // pred_check_branch
          %304 = sbr.rel (%p302) target = $region48
        $region47: #{tpu_custom_call.1} parent=43 // pred_region
          %s305 = smul.u32 %s24, 2
          %s306 = sadd.s32 %s305, %s25
          %s307 = smul.u32 4, %s306
          %p308 = scmp.lt.s32.totalorder %s307, 7
          %s309 = scalar_select %p308, %s307, 7
          %s310 = smul.addr %s309, 4
          %s311 = scalar_lea.vmem %s0, %s310
          %s312 = smul.u32 %s24, 2
          %s313 = sadd.s32 %s312, %s25
          %s314 = smul.u32 4, %s313
        $region48: #{tpu_custom_call.1} parent=43 // pred_fallthru
          _
      $region44: #{tpu_custom_call.1} parent=5 // pred_fallthru
        _
      %p315 = scmp.le.s32.totalorder 1, %s17
      %p316 = scmp.lt.s32.totalorder %s17, 3
      %p317 = pnand %p315, %p316
      %p318 = pneg %p317
      // Predicated region
      $region49: #{tpu_custom_call.1} parent=5 // pred_check
        _
      $region50: #{tpu_custom_call.1} parent=5 // pred_check_branch
        %320 = sbr.rel (%p317) target = $region52
      $region51: #{tpu_custom_call.1} parent=5 // pred_region
        %s321 = ssub.s32 %s17, 1
        // Predicated region
        $region53: #{tpu_custom_call.1} parent=51 // pred_check
          %p322 = pneg %p101
        $region54: #{tpu_custom_call.1} parent=51 // pred_check_branch
          %324 = sbr.rel (%p322) target = $region56
        $region55: #{tpu_custom_call.1} parent=51 // pred_region
          %325 = dma.done [#allocation6], 4096
        $region56: #{tpu_custom_call.1} parent=51 // pred_fallthru
          _
        // Predicated region
        $region57: #{tpu_custom_call.1} parent=51 // pred_check
          %p326 = pneg %p143
        $region58: #{tpu_custom_call.1} parent=51 // pred_check_branch
          %328 = sbr.rel (%p326) target = $region60
        $region59: #{tpu_custom_call.1} parent=51 // pred_region
          %329 = dma.done [#allocation9], 1024
        $region60: #{tpu_custom_call.1} parent=51 // pred_fallthru
          _
        // Predicated region
        $region61: #{tpu_custom_call.1} parent=51 // pred_check
          %p330 = pneg %p185
        $region62: #{tpu_custom_call.1} parent=51 // pred_check_branch
          %332 = sbr.rel (%p330) target = $region64
        $region63: #{tpu_custom_call.1} parent=51 // pred_region
          %333 = dma.done [#allocation9], 1024
        $region64: #{tpu_custom_call.1} parent=51 // pred_fallthru
          _
        %s334 = smul.u32 %s26, 2
        %s335 = sadd.s32 %s334, %s27
        %s336 = smul.u32 4, %s335
        %p337 = scmp.lt.s32.totalorder %s336, 7
        %s338 = scalar_select %p337, %s336, 7
        %s339 = smul.addr %s338, 4
        %s340 = scalar_lea.vmem %s0, %s339
        %p341 = pneg %p59
        %p342 = pneg %p56
        %p343 = pneg %p80
        %p344 = pneg %p77
        %p345 = pneg %p101
        %p346 = pneg %p98
        %p347 = pneg %p122
        %p348 = pneg %p119
        %p349 = pneg %p143
        %p350 = pneg %p140
        %p351 = pneg %p164
        %p352 = pneg %p161
        %p353 = pneg %p185
        %p354 = pneg %p182
        %p355 = pneg %p206
        %p356 = pneg %p203
        %p357 = pneg %p232
        %p358 = pneg %p229
        %s359 = smul.u32 %s26, 2
        %s360 = sadd.s32 %s359, %s27
        %s361 = smul.u32 4, %s360
        %p362 = scmp.lt.s32.totalorder %s361, 7
        %s363 = scalar_select %p362, %s361, 7
        %s364 = smul.addr %s363, 4
        %s365 = scalar_lea.vmem %s0, %s364
        %s366 = smul.u32 %s26, 2
        %s367 = sadd.s32 %s366, %s27
        %s368 = smul.u32 4, %s367
        %p370 = scmp.eq.s32.totalorder %s27, 0
        // Predicated region
        $region65: #{tpu_custom_call.1} parent=51 // pred_check
          %p371 = pneg %p370
        $region66: #{tpu_custom_call.1} parent=51 // pred_check_branch
          %373 = sbr.rel (%p371) target = $region68
        $region67: #{tpu_custom_call.1} parent=51 // pred_region
          %374 = vst [vmem:[#allocation2] sm:$0xff] 0.0
          %375 = vst [vmem:[#allocation3] sm:$0xff] 0.0
        $region68: #{tpu_custom_call.1} parent=51 // pred_fallthru
          _
        %v376 = vld [vmem:[%s365] sm:$0xf]
        %v377 = vld [vmem:[%s365 + $0x4] sm:$0xf]
        %v378 = vld [vmem:[%s365 + $0x8] sm:$0xf]
        %v379 = vld [vmem:[%s365 + $0xc] sm:$0xf]
        %v380 = vld [vmem:[%s1] sm:$0xff]
        %v381 = vld [vmem:[%s1 + $0x8] sm:$0xff]
        %v382 = vld [vmem:[%s1 + $0x10] sm:$0xff]
        %v383 = vld [vmem:[%s1 + $0x18] sm:$0xff]
        %v384 = vld [vmem:[%s3] sm:$0xf]
        %v386 = vlaneseq
        %v387 = vshrl.u32 %v386, 7
        %v388 = vsub.s32 0, %v387
        %v389 = vrot.slane %v384, %v388
        %v390 = vlaneseq
        %v391 = vshrl.u32 %v390, 7
        %v392 = vsub.s32 1, %v391
        %v393 = vrot.slane %v384, %v392
        %v394 = vlaneseq
        %v395 = vshrl.u32 %v394, 7
        %v396 = vsub.s32 2, %v395
        %v397 = vrot.slane %v384, %v396
        %v398 = vlaneseq
        %v399 = vshrl.u32 %v398, 7
        %v400 = vsub.s32 3, %v399
        %v401 = vrot.slane %v384, %v400
        %v410 = vunpack.c.l.b16 %v376
        %v411 = vunpack.c.l.b16 %v377
        %v412 = vunpack.c.l.b16 %v378
        %v413 = vunpack.c.l.b16 %v379
        %v414 = vpack.c.b16 %v411, %v410
        %v415 = vpack.c.b16 %v413, %v412
        %v420 = vunpack.c.l.b16 %v380
        %v421 = vunpack.c.h.b16 %v380
        %v422 = vunpack.c.l.b16 %v381
        %v423 = vunpack.c.h.b16 %v381
        %v424 = vunpack.c.l.b16 %v382
        %v425 = vunpack.c.h.b16 %v382
        %v426 = vunpack.c.l.b16 %v383
        %v427 = vunpack.c.h.b16 %v383
        %v428 = vpack.c.b16 %v424, %v420
        %v429 = vpack.c.b16 %v425, %v421
        %v430 = vpack.c.b16 %v426, %v422
        %v431 = vpack.c.b16 %v427, %v423
        %vm436 = vcmask 130048
        %v438 = vsel %vm436, %v414, 0
        %v441 = vsel %vm436, %v415, 0
        %443 = vmatprep.subr.bf16.mxu0 %v429
        %444 = vmatpush1.bf16.msra.mxu0 %v428
        %445 = vmatprep.subr.bf16.mxu0 0
        %446 = vmatpush1.bf16.msra.mxu0 0
        %447 = vmatprep.subr.bf16.mxu0 0
        %448 = vmatpush1.bf16.msra.mxu0 0
        %449 = vmatprep.subr.bf16.mxu0 0
        %450 = vmatpush1.bf16.msra.mxu0 0
        %451 = vmatprep.subr.bf16.mxu0 0
        %452 = vmatpush1.bf16.msra.mxu0 0
        %453 = vmatprep.subr.bf16.mxu0 0
        %454 = vmatpush1.bf16.msra.mxu0 0
        %455 = vmatprep.subr.bf16.mxu0 0
        %456 = vmatpush1.bf16.msra.mxu0 0
        %457 = vmatprep.subr.bf16.mxu0 0
        %458 = vmatpush1.bf16.msra.mxu0 0
        %459 = vmatprep.subr.bf16.mxu0 0
        %460 = vmatpush1.bf16.msra.mxu0 0
        %461 = vmatprep.subr.bf16.mxu0 0
        %462 = vmatpush1.bf16.msra.mxu0 0
        %463 = vmatprep.subr.bf16.mxu0 0
        %464 = vmatpush1.bf16.msra.mxu0 0
        %465 = vmatprep.subr.bf16.mxu0 0
        %466 = vmatpush1.bf16.msra.mxu0 0
        %467 = vmatprep.subr.bf16.mxu0 0
        %468 = vmatpush1.bf16.msra.mxu0 0
        %469 = vmatprep.subr.bf16.mxu0 0
        %470 = vmatpush1.bf16.msra.mxu0 0
        %471 = vmatprep.subr.bf16.mxu0 0
        %472 = vmatpush1.bf16.msra.mxu0 0
        %473 = vmatprep.subr.bf16.mxu0 0
        %474 = vmatpush1.bf16.msra.mxu0 0
        %475 = vmatprep.mubr.bf16.mxu0 0
        %476 = vmatmul.mubr.bf16.gmra.mrb[0].mxu0 %v438
        %v477 = vpop.f32.mrb[0].mxu0
        %v478 = vadd.f32 %v389, %v477
        %v479 = vpop.f32.mrb[0].mxu0
        %v480 = vadd.f32 %v393, %v479
        %v481 = vpop.f32.mrb[0].mxu0
        %v482 = vadd.f32 %v389, %v481
        %v483 = vpop.f32.mrb[0].mxu0
        %v484 = vadd.f32 %v393, %v483
        %485 = vmatprep.mubr.bf16.mxu0 0
        %486 = vmatmul.mubr.bf16.gmra.mrb[0].mxu0 %v441
        %v487 = vpop.f32.mrb[0].mxu0
        %v488 = vadd.f32 %v389, %v487
        %v489 = vpop.f32.mrb[0].mxu0
        %v490 = vadd.f32 %v393, %v489
        %v491 = vpop.f32.mrb[0].mxu0
        %v492 = vadd.f32 %v389, %v491
        %v493 = vpop.f32.mrb[0].mxu0
        %v494 = vadd.f32 %v393, %v493
        %495 = vdwg.mxu0
        %496 = vmatprep.subr.bf16.mxu0 %v431
        %497 = vmatpush1.bf16.msra.mxu0 %v430
        %498 = vmatprep.subr.bf16.mxu0 0
        %499 = vmatpush1.bf16.msra.mxu0 0
        %500 = vmatprep.subr.bf16.mxu0 0
        %501 = vmatpush1.bf16.msra.mxu0 0
        %502 = vmatprep.subr.bf16.mxu0 0
        %503 = vmatpush1.bf16.msra.mxu0 0
        %504 = vmatprep.subr.bf16.mxu0 0
        %505 = vmatpush1.bf16.msra.mxu0 0
        %506 = vmatprep.subr.bf16.mxu0 0
        %507 = vmatpush1.bf16.msra.mxu0 0
        %508 = vmatprep.subr.bf16.mxu0 0
        %509 = vmatpush1.bf16.msra.mxu0 0
        %510 = vmatprep.subr.bf16.mxu0 0
        %511 = vmatpush1.bf16.msra.mxu0 0
        %512 = vmatprep.subr.bf16.mxu0 0
        %513 = vmatpush1.bf16.msra.mxu0 0
        %514 = vmatprep.subr.bf16.mxu0 0
        %515 = vmatpush1.bf16.msra.mxu0 0
        %516 = vmatprep.subr.bf16.mxu0 0
        %517 = vmatpush1.bf16.msra.mxu0 0
        %518 = vmatprep.subr.bf16.mxu0 0
        %519 = vmatpush1.bf16.msra.mxu0 0
        %520 = vmatprep.subr.bf16.mxu0 0
        %521 = vmatpush1.bf16.msra.mxu0 0
        %522 = vmatprep.subr.bf16.mxu0 0
        %523 = vmatpush1.bf16.msra.mxu0 0
        %524 = vmatprep.subr.bf16.mxu0 0
        %525 = vmatpush1.bf16.msra.mxu0 0
        %526 = vmatprep.subr.bf16.mxu0 0
        %527 = vmatpush1.bf16.msra.mxu0 0
        %528 = vmatprep.mubr.bf16.mxu0 0
        %529 = vmatmul.mubr.bf16.gmra.mrb[0].mxu0 %v438
        %v530 = vpop.f32.mrb[0].mxu0
        %v531 = vadd.f32 %v397, %v530
        %v532 = vpop.f32.mrb[0].mxu0
        %v533 = vadd.f32 %v401, %v532
        %v534 = vpop.f32.mrb[0].mxu0
        %v535 = vadd.f32 %v397, %v534
        %v536 = vpop.f32.mrb[0].mxu0
        %v537 = vadd.f32 %v401, %v536
        %538 = vmatprep.mubr.bf16.mxu0 0
        %539 = vmatmul.mubr.bf16.gmra.mrb[0].mxu0 %v441
        %v540 = vpop.f32.mrb[0].mxu0
        %v541 = vadd.f32 %v397, %v540
        %v542 = vpop.f32.mrb[0].mxu0
        %v543 = vadd.f32 %v401, %v542
        %v544 = vpop.f32.mrb[0].mxu0
        %v545 = vadd.f32 %v397, %v544
        %v546 = vpop.f32.mrb[0].mxu0
        %v547 = vadd.f32 %v401, %v546
        %548 = vdwg.mxu0
        %549 = vst [vmem:[#allocation4] sm:$0xff] %v478
        %550 = vst [vmem:[#allocation4 + $0x8] sm:$0xff] %v480
        %551 = vst [vmem:[#allocation4 + $0x10] sm:$0xff] %v531
        %552 = vst [vmem:[#allocation4 + $0x18] sm:$0xff] %v533
        %553 = vst [vmem:[#allocation4 + $0x20] sm:$0xff] %v482
        %554 = vst [vmem:[#allocation4 + $0x28] sm:$0xff] %v484
        %555 = vst [vmem:[#allocation4 + $0x30] sm:$0xff] %v535
        %556 = vst [vmem:[#allocation4 + $0x38] sm:$0xff] %v537
        %557 = vst [vmem:[#allocation4 + $0x40] sm:$0xff] %v488
        %558 = vst [vmem:[#allocation4 + $0x48] sm:$0xff] %v490
        %559 = vst [vmem:[#allocation4 + $0x50] sm:$0xff] %v541
        %560 = vst [vmem:[#allocation4 + $0x58] sm:$0xff] %v543
        %561 = vst [vmem:[#allocation4 + $0x60] sm:$0xff] %v492
        %562 = vst [vmem:[#allocation4 + $0x68] sm:$0xff] %v494
        %563 = vst [vmem:[#allocation4 + $0x70] sm:$0xff] %v545
        %564 = vst [vmem:[#allocation4 + $0x78] sm:$0xff] %v547
        %v565 = vld [vmem:[#allocation2] sm:$0xff]
        %v566 = vld [vmem:[#allocation3] sm:$0xff]
        %s567 = smul.u32 0, 4
        %s568 = smul.addr %s567, 8
        %s569 = scalar_lea.vmem [#allocation4], %s568
        %v570 = vld [vmem:[%s569] sm:$0xff]
        %v571 = vld [vmem:[%s569 + $0x8] sm:$0xff]
        %v572 = vld [vmem:[%s569 + $0x10] sm:$0xff]
        %v573 = vld [vmem:[%s569 + $0x18] sm:$0xff]
        %v574 = vpack.c.bf16 %v565, %v565
        %v575 = vld [vmem:[#allocation5] sm:$0xff]
        %v576 = vld [vmem:[#allocation5 + $0x8] sm:$0xff]
        %v577 = vld [vmem:[#allocation5 + $0x10] sm:$0xff]
        %v578 = vld [vmem:[#allocation5 + $0x18] sm:$0xff]
        %v579 = vld [vmem:[#allocation5 + $0x20] sm:$0xff]
        %v580 = vld [vmem:[#allocation5 + $0x28] sm:$0xff]
        %v581 = vld [vmem:[#allocation5 + $0x30] sm:$0xff]
        %v582 = vld [vmem:[#allocation5 + $0x38] sm:$0xff]
        %v583 = vld [vmem:[#allocation5 + $0x40] sm:$0xff]
        %v584 = vld [vmem:[#allocation5 + $0x48] sm:$0xff]
        %v585 = vld [vmem:[#allocation5 + $0x50] sm:$0xff]
        %v586 = vld [vmem:[#allocation5 + $0x58] sm:$0xff]
        %v587 = vld [vmem:[#allocation5 + $0x60] sm:$0xff]
        %v588 = vld [vmem:[#allocation5 + $0x68] sm:$0xff]
        %v589 = vld [vmem:[#allocation5 + $0x70] sm:$0xff]
        %v590 = vld [vmem:[#allocation5 + $0x78] sm:$0xff]
        %v591 = vld [vmem:[#allocation5 + $0x80] sm:$0xff]
        %v592 = vld [vmem:[#allocation5 + $0x88] sm:$0xff]
        %v593 = vld [vmem:[#allocation5 + $0x90] sm:$0xff]
        %v594 = vld [vmem:[#allocation5 + $0x98] sm:$0xff]
        %v595 = vld [vmem:[#allocation5 + $0xa0] sm:$0xff]
        %v596 = vld [vmem:[#allocation5 + $0xa8] sm:$0xff]
        %v597 = vld [vmem:[#allocation5 + $0xb0] sm:$0xff]
        %v598 = vld [vmem:[#allocation5 + $0xb8] sm:$0xff]
        %v599 = vld [vmem:[#allocation5 + $0xc0] sm:$0xff]
        %v600 = vld [vmem:[#allocation5 + $0xc8] sm:$0xff]
        %v601 = vld [vmem:[#allocation5 + $0xd0] sm:$0xff]
        %v602 = vld [vmem:[#allocation5 + $0xd8] sm:$0xff]
        %v603 = vld [vmem:[#allocation5 + $0xe0] sm:$0xff]
        %v604 = vld [vmem:[#allocation5 + $0xe8] sm:$0xff]
        %v605 = vld [vmem:[#allocation5 + $0xf0] sm:$0xff]
        %v606 = vld [vmem:[#allocation5 + $0xf8] sm:$0xff]
        %v639 = vunpack.c.l.b16 %v575
        %v640 = vunpack.c.h.b16 %v575
        %v641 = vunpack.c.l.b16 %v576
        %v642 = vunpack.c.h.b16 %v576
        %v643 = vunpack.c.l.b16 %v577
        %v644 = vunpack.c.h.b16 %v577
        %v645 = vunpack.c.l.b16 %v578
        %v646 = vunpack.c.h.b16 %v578
        %v647 = vunpack.c.l.b16 %v579
        %v648 = vunpack.c.h.b16 %v579
        %v649 = vunpack.c.l.b16 %v580
        %v650 = vunpack.c.h.b16 %v580
        %v651 = vunpack.c.l.b16 %v581
        %v652 = vunpack.c.h.b16 %v581
        %v653 = vunpack.c.l.b16 %v582
        %v654 = vunpack.c.h.b16 %v582
        %v655 = vunpack.c.l.b16 %v583
        %v656 = vunpack.c.h.b16 %v583
        %v657 = vunpack.c.l.b16 %v584
        %v658 = vunpack.c.h.b16 %v584
        %v659 = vunpack.c.l.b16 %v585
        %v660 = vunpack.c.h.b16 %v585
        %v661 = vunpack.c.l.b16 %v586
        %v662 = vunpack.c.h.b16 %v586
        %v663 = vunpack.c.l.b16 %v587
        %v664 = vunpack.c.h.b16 %v587
        %v665 = vunpack.c.l.b16 %v588
        %v666 = vunpack.c.h.b16 %v588
        %v667 = vunpack.c.l.b16 %v589
        %v668 = vunpack.c.h.b16 %v589
        %v669 = vunpack.c.l.b16 %v590
        %v670 = vunpack.c.h.b16 %v590
        %v671 = vunpack.c.l.b16 %v591
        %v672 = vunpack.c.h.b16 %v591
        %v673 = vunpack.c.l.b16 %v592
        %v674 = vunpack.c.h.b16 %v592
        %v675 = vunpack.c.l.b16 %v593
        %v676 = vunpack.c.h.b16 %v593
        %v677 = vunpack.c.l.b16 %v594
        %v678 = vunpack.c.h.b16 %v594
        %v679 = vunpack.c.l.b16 %v595
        %v680 = vunpack.c.h.b16 %v595
        %v681 = vunpack.c.l.b16 %v596
        %v682 = vunpack.c.h.b16 %v596
        %v683 = vunpack.c.l.b16 %v597
        %v684 = vunpack.c.h.b16 %v597
        %v685 = vunpack.c.l.b16 %v598
        %v686 = vunpack.c.h.b16 %v598
        %v687 = vunpack.c.l.b16 %v599
        %v688 = vunpack.c.h.b16 %v599
        %v689 = vunpack.c.l.b16 %v600
        %v690 = vunpack.c.h.b16 %v600
        %v691 = vunpack.c.l.b16 %v601
        %v692 = vunpack.c.h.b16 %v601
        %v693 = vunpack.c.l.b16 %v602
        %v694 = vunpack.c.h.b16 %v602
        %v695 = vunpack.c.l.b16 %v603
        %v696 = vunpack.c.h.b16 %v603
        %v697 = vunpack.c.l.b16 %v604
        %v698 = vunpack.c.h.b16 %v604
        %v699 = vunpack.c.l.b16 %v605
        %v700 = vunpack.c.h.b16 %v605
        %v701 = vunpack.c.l.b16 %v606
        %v702 = vunpack.c.h.b16 %v606
        %v703 = vpack.c.b16 %v643, %v639
        %v704 = vpack.c.b16 %v644, %v640
        %v705 = vpack.c.b16 %v645, %v641
        %v706 = vpack.c.b16 %v646, %v642
        %v707 = vpack.c.b16 %v651, %v647
        %v708 = vpack.c.b16 %v652, %v648
        %v709 = vpack.c.b16 %v653, %v649
        %v710 = vpack.c.b16 %v654, %v650
        %v711 = vpack.c.b16 %v659, %v655
        %v712 = vpack.c.b16 %v660, %v656
        %v713 = vpack.c.b16 %v661, %v657
        %v714 = vpack.c.b16 %v662, %v658
        %v715 = vpack.c.b16 %v667, %v663
        %v716 = vpack.c.b16 %v668, %v664
        %v717 = vpack.c.b16 %v669, %v665
        %v718 = vpack.c.b16 %v670, %v666
        %v719 = vpack.c.b16 %v675, %v671
        %v720 = vpack.c.b16 %v676, %v672
        %v721 = vpack.c.b16 %v677, %v673
        %v722 = vpack.c.b16 %v678, %v674
        %v723 = vpack.c.b16 %v683, %v679
        %v724 = vpack.c.b16 %v684, %v680
        %v725 = vpack.c.b16 %v685, %v681
        %v726 = vpack.c.b16 %v686, %v682
        %v727 = vpack.c.b16 %v691, %v687
        %v728 = vpack.c.b16 %v692, %v688
        %v729 = vpack.c.b16 %v693, %v689
        %v730 = vpack.c.b16 %v694, %v690
        %v731 = vpack.c.b16 %v699, %v695
        %v732 = vpack.c.b16 %v700, %v696
        %v733 = vpack.c.b16 %v701, %v697
        %v734 = vpack.c.b16 %v702, %v698
        %767 = vmatprep.subr.bf16.mxu0 %v704
        %768 = vmatpush1.bf16.msra.mxu0 %v703
        %769 = vmatprep.subr.bf16.mxu0 %v708
        %770 = vmatpush1.bf16.msra.mxu0 %v707
        %771 = vmatprep.subr.bf16.mxu0 %v712
        %772 = vmatpush1.bf16.msra.mxu0 %v711
        %773 = vmatprep.subr.bf16.mxu0 %v716
        %774 = vmatpush1.bf16.msra.mxu0 %v715
        %775 = vmatprep.subr.bf16.mxu0 %v720
        %776 = vmatpush1.bf16.msra.mxu0 %v719
        %777 = vmatprep.subr.bf16.mxu0 %v724
        %778 = vmatpush1.bf16.msra.mxu0 %v723
        %779 = vmatprep.subr.bf16.mxu0 %v728
        %780 = vmatpush1.bf16.msra.mxu0 %v727
        %781 = vmatprep.subr.bf16.mxu0 %v732
        %782 = vmatpush1.bf16.msra.mxu0 %v731
        %783 = vmatprep.subr.bf16.mxu0 0
        %784 = vmatpush1.bf16.msra.mxu0 0
        %785 = vmatprep.subr.bf16.mxu0 0
        %786 = vmatpush1.bf16.msra.mxu0 0
        %787 = vmatprep.subr.bf16.mxu0 0
        %788 = vmatpush1.bf16.msra.mxu0 0
        %789 = vmatprep.subr.bf16.mxu0 0
        %790 = vmatpush1.bf16.msra.mxu0 0
        %791 = vmatprep.subr.bf16.mxu0 0
        %792 = vmatpush1.bf16.msra.mxu0 0
        %793 = vmatprep.subr.bf16.mxu0 0
        %794 = vmatpush1.bf16.msra.mxu0 0
        %795 = vmatprep.subr.bf16.mxu0 0
        %796 = vmatpush1.bf16.msra.mxu0 0
        %797 = vmatprep.subr.bf16.mxu0 0
        %798 = vmatpush1.bf16.msra.mxu0 0
        %799 = vmatprep.mubr.bf16.mxu0 0
        %800 = vmatmul.mubr.bf16.gmra.mrb[0].mxu0 %v574
        %v801 = vpop.f32.mrb[0].mxu0
        %v802 = vadd.f32 0.0, %v801
        %v803 = vpop.f32.mrb[0].mxu0
        %v804 = vadd.f32 0.0, %v803
        %v805 = vpop.f32.mrb[0].mxu0
        %v806 = vpop.f32.mrb[0].mxu0
        %807 = vdwg.mxu0
        %808 = vmatprep.subr.bf16.mxu0 %v706
        %809 = vmatpush1.bf16.msra.mxu0 %v705
        %810 = vmatprep.subr.bf16.mxu0 %v710
        %811 = vmatpush1.bf16.msra.mxu0 %v709
        %812 = vmatprep.subr.bf16.mxu0 %v714
        %813 = vmatpush1.bf16.msra.mxu0 %v713
        %814 = vmatprep.subr.bf16.mxu0 %v718
        %815 = vmatpush1.bf16.msra.mxu0 %v717
        %816 = vmatprep.subr.bf16.mxu0 %v722
        %817 = vmatpush1.bf16.msra.mxu0 %v721
        %818 = vmatprep.subr.bf16.mxu0 %v726
        %819 = vmatpush1.bf16.msra.mxu0 %v725
        %820 = vmatprep.subr.bf16.mxu0 %v730
        %821 = vmatpush1.bf16.msra.mxu0 %v729
        %822 = vmatprep.subr.bf16.mxu0 %v734
        %823 = vmatpush1.bf16.msra.mxu0 %v733
        %824 = vmatprep.subr.bf16.mxu0 0
        %825 = vmatpush1.bf16.msra.mxu0 0
        %826 = vmatprep.subr.bf16.mxu0 0
        %827 = vmatpush1.bf16.msra.mxu0 0
        %828 = vmatprep.subr.bf16.mxu0 0
        %829 = vmatpush1.bf16.msra.mxu0 0
        %830 = vmatprep.subr.bf16.mxu0 0
        %831 = vmatpush1.bf16.msra.mxu0 0
        %832 = vmatprep.subr.bf16.mxu0 0
        %833 = vmatpush1.bf16.msra.mxu0 0
        %834 = vmatprep.subr.bf16.mxu0 0
        %835 = vmatpush1.bf16.msra.mxu0 0
        %836 = vmatprep.subr.bf16.mxu0 0
        %837 = vmatpush1.bf16.msra.mxu0 0
        %838 = vmatprep.subr.bf16.mxu0 0
        %839 = vmatpush1.bf16.msra.mxu0 0
        %840 = vmatprep.mubr.bf16.mxu0 0
        %841 = vmatmul.mubr.bf16.gmra.mrb[0].mxu0 %v574
        %v842 = vpop.f32.mrb[0].mxu0
        %v843 = vadd.f32 0.0, %v842
        %v844 = vpop.f32.mrb[0].mxu0
        %v845 = vadd.f32 0.0, %v844
        %v846 = vpop.f32.mrb[0].mxu0
        %v847 = vpop.f32.mrb[0].mxu0
        %848 = vdwg.mxu0
        %v849 = vadd.f32 %v570, %v802
        %v850 = vadd.f32 %v571, %v804
        %v851 = vadd.f32 %v572, %v843
        %v852 = vadd.f32 %v573, %v845
        %v853 = vxor.u32 %v849, 2147483648
        %v854 = vxor.u32 %v850, 2147483648
        %v855 = vxor.u32 %v851, 2147483648
        %v856 = vmul.f32 %v853, 1.442695
        %v857 = vpow.pop %v856
        %v858 = vmul.f32 %v854, 1.442695
        %v859 = vpow.pop %v858
        %v860 = vmul.f32 %v855, 1.442695
        %v861 = vpow.pop %v860
        %v862 = vadd.f32 %v857, 1.0
        %v863 = vadd.f32 %v859, 1.0
        %v864 = vadd.f32 %v861, 1.0
        %v865 = vrcp.pop %v862
        %v866 = vmul.f32 1.0, %v865
        %v867 = vrcp.pop %v863
        %v868 = vmul.f32 1.0, %v867
        %v869 = vrcp.pop %v864
        %v870 = vmul.f32 1.0, %v869
        %v871 = vtanh.pop %v852
        %v872 = vmul.f32 %v868, %v566
        %v873 = vmul.f32 %v866, %v871
        %v874 = vadd.f32 %v872, %v873
        %v875 = vtanh.pop %v874
        %v876 = vmul.f32 %v870, %v875
        %s877 = smul.u32 1, 4
        %s878 = smul.addr %s877, 8
        %s879 = scalar_lea.vmem [#allocation4], %s878
        %v880 = vld [vmem:[%s879] sm:$0xff]
        %v881 = vld [vmem:[%s879 + $0x8] sm:$0xff]
        %v882 = vld [vmem:[%s879 + $0x10] sm:$0xff]
        %v883 = vld [vmem:[%s879 + $0x18] sm:$0xff]
        %v884 = vpack.c.bf16 %v876, %v876
        %885 = vmatprep.subr.bf16.mxu0 %v704
        %886 = vmatpush1.bf16.msra.mxu0 %v703
        %887 = vmatprep.subr.bf16.mxu0 %v708
        %888 = vmatpush1.bf16.msra.mxu0 %v707
        %889 = vmatprep.subr.bf16.mxu0 %v712
        %890 = vmatpush1.bf16.msra.mxu0 %v711
        %891 = vmatprep.subr.bf16.mxu0 %v716
        %892 = vmatpush1.bf16.msra.mxu0 %v715
        %893 = vmatprep.subr.bf16.mxu0 %v720
        %894 = vmatpush1.bf16.msra.mxu0 %v719
        %895 = vmatprep.subr.bf16.mxu0 %v724
        %896 = vmatpush1.bf16.msra.mxu0 %v723
        %897 = vmatprep.subr.bf16.mxu0 %v728
        %898 = vmatpush1.bf16.msra.mxu0 %v727
        %899 = vmatprep.subr.bf16.mxu0 %v732
        %900 = vmatpush1.bf16.msra.mxu0 %v731
        %901 = vmatprep.subr.bf16.mxu0 0
        %902 = vmatpush1.bf16.msra.mxu0 0
        %903 = vmatprep.subr.bf16.mxu0 0
        %904 = vmatpush1.bf16.msra.mxu0 0
        %905 = vmatprep.subr.bf16.mxu0 0
        %906 = vmatpush1.bf16.msra.mxu0 0
        %907 = vmatprep.subr.bf16.mxu0 0
        %908 = vmatpush1.bf16.msra.mxu0 0
        %909 = vmatprep.subr.bf16.mxu0 0
        %910 = vmatpush1.bf16.msra.mxu0 0
        %911 = vmatprep.subr.bf16.mxu0 0
        %912 = vmatpush1.bf16.msra.mxu0 0
        %913 = vmatprep.subr.bf16.mxu0 0
        %914 = vmatpush1.bf16.msra.mxu0 0
        %915 = vmatprep.subr.bf16.mxu0 0
        %916 = vmatpush1.bf16.msra.mxu0 0
        %917 = vmatprep.mubr.bf16.mxu0 0
        %918 = vmatmul.mubr.bf16.gmra.mrb[0].mxu0 %v884
        %v919 = vpop.f32.mrb[0].mxu0
        %v920 = vadd.f32 0.0, %v919
        %v921 = vpop.f32.mrb[0].mxu0
        %v922 = vadd.f32 0.0, %v921
        %v923 = vpop.f32.mrb[0].mxu0
        %v924 = vpop.f32.mrb[0].mxu0
        %925 = vdwg.mxu0
        %926 = vmatprep.subr.bf16.mxu0 %v706
        %927 = vmatpush1.bf16.msra.mxu0 %v705
        %928 = vmatprep.subr.bf16.mxu0 %v710
        %929 = vmatpush1.bf16.msra.mxu0 %v709
        %930 = vmatprep.subr.bf16.mxu0 %v714
        %931 = vmatpush1.bf16.msra.mxu0 %v713
        %932 = vmatprep.subr.bf16.mxu0 %v718
        %933 = vmatpush1.bf16.msra.mxu0 %v717
        %934 = vmatprep.subr.bf16.mxu0 %v722
        %935 = vmatpush1.bf16.msra.mxu0 %v721
        %936 = vmatprep.subr.bf16.mxu0 %v726
        %937 = vmatpush1.bf16.msra.mxu0 %v725
        %938 = vmatprep.subr.bf16.mxu0 %v730
        %939 = vmatpush1.bf16.msra.mxu0 %v729
        %940 = vmatprep.subr.bf16.mxu0 %v734
        %941 = vmatpush1.bf16.msra.mxu0 %v733
        %942 = vmatprep.subr.bf16.mxu0 0
        %943 = vmatpush1.bf16.msra.mxu0 0
        %944 = vmatprep.subr.bf16.mxu0 0
        %945 = vmatpush1.bf16.msra.mxu0 0
        %946 = vmatprep.subr.bf16.mxu0 0
        %947 = vmatpush1.bf16.msra.mxu0 0
        %948 = vmatprep.subr.bf16.mxu0 0
        %949 = vmatpush1.bf16.msra.mxu0 0
        %950 = vmatprep.subr.bf16.mxu0 0
        %951 = vmatpush1.bf16.msra.mxu0 0
        %952 = vmatprep.subr.bf16.mxu0 0
        %953 = vmatpush1.bf16.msra.mxu0 0
        %954 = vmatprep.subr.bf16.mxu0 0
        %955 = vmatpush1.bf16.msra.mxu0 0
        %956 = vmatprep.subr.bf16.mxu0 0
        %957 = vmatpush1.bf16.msra.mxu0 0
        %958 = vmatprep.mubr.bf16.mxu0 0
        %959 = vmatmul.mubr.bf16.gmra.mrb[0].mxu0 %v884
        %v960 = vpop.f32.mrb[0].mxu0
        %v961 = vadd.f32 0.0, %v960
        %v962 = vpop.f32.mrb[0].mxu0
        %v963 = vadd.f32 0.0, %v962
        %v964 = vpop.f32.mrb[0].mxu0
        %v965 = vpop.f32.mrb[0].mxu0
        %966 = vdwg.mxu0
        %v967 = vadd.f32 %v880, %v920
        %v968 = vadd.f32 %v881, %v922
        %v969 = vadd.f32 %v882, %v961
        %v970 = vadd.f32 %v883, %v963
        %v971 = vxor.u32 %v967, 2147483648
        %v972 = vxor.u32 %v968, 2147483648
        %v973 = vxor.u32 %v969, 2147483648
        %v974 = vmul.f32 %v971, 1.442695
        %v975 = vpow.pop %v974
        %v976 = vmul.f32 %v972, 1.442695
        %v977 = vpow.pop %v976
        %v978 = vmul.f32 %v973, 1.442695
        %v979 = vpow.pop %v978
        %v980 = vadd.f32 %v975, 1.0
        %v981 = vadd.f32 %v977, 1.0
        %v982 = vadd.f32 %v979, 1.0
        %v983 = vrcp.pop %v980
        %v984 = vmul.f32 1.0, %v983
        %v985 = vrcp.pop %v981
        %v986 = vmul.f32 1.0, %v985
        %v987 = vrcp.pop %v982
        %v988 = vmul.f32 1.0, %v987
        %v989 = vtanh.pop %v970
        %v990 = vmul.f32 %v986, %v874
        %v991 = vmul.f32 %v984, %v989
        %v992 = vadd.f32 %v990, %v991
        %v993 = vtanh.pop %v992
        %v994 = vmul.f32 %v988, %v993
        %s995 = smul.u32 2, 4
        %s996 = smul.addr %s995, 8
        %s997 = scalar_lea.vmem [#allocation4], %s996
        %v998 = vld [vmem:[%s997] sm:$0xff]
        %v999 = vld [vmem:[%s997 + $0x8] sm:$0xff]
        %v1000 = vld [vmem:[%s997 + $0x10] sm:$0xff]
        %v1001 = vld [vmem:[%s997 + $0x18] sm:$0xff]
        %v1002 = vpack.c.bf16 %v994, %v994
        %1003 = vmatprep.subr.bf16.mxu0 %v704
        %1004 = vmatpush1.bf16.msra.mxu0 %v703
        %1005 = vmatprep.subr.bf16.mxu0 %v708
        %1006 = vmatpush1.bf16.msra.mxu0 %v707
        %1007 = vmatprep.subr.bf16.mxu0 %v712
        %1008 = vmatpush1.bf16.msra.mxu0 %v711
        %1009 = vmatprep.subr.bf16.mxu0 %v716
        %1010 = vmatpush1.bf16.msra.mxu0 %v715
        %1011 = vmatprep.subr.bf16.mxu0 %v720
        %1012 = vmatpush1.bf16.msra.mxu0 %v719
        %1013 = vmatprep.subr.bf16.mxu0 %v724
        %1014 = vmatpush1.bf16.msra.mxu0 %v723
        %1015 = vmatprep.subr.bf16.mxu0 %v728
        %1016 = vmatpush1.bf16.msra.mxu0 %v727
        %1017 = vmatprep.subr.bf16.mxu0 %v732
        %1018 = vmatpush1.bf16.msra.mxu0 %v731
        %1019 = vmatprep.subr.bf16.mxu0 0
        %1020 = vmatpush1.bf16.msra.mxu0 0
        %1021 = vmatprep.subr.bf16.mxu0 0
        %1022 = vmatpush1.bf16.msra.mxu0 0
        %1023 = vmatprep.subr.bf16.mxu0 0
        %1024 = vmatpush1.bf16.msra.mxu0 0
        %1025 = vmatprep.subr.bf16.mxu0 0
        %1026 = vmatpush1.bf16.msra.mxu0 0
        %1027 = vmatprep.subr.bf16.mxu0 0
        %1028 = vmatpush1.bf16.msra.mxu0 0
        %1029 = vmatprep.subr.bf16.mxu0 0
        %1030 = vmatpush1.bf16.msra.mxu0 0
        %1031 = vmatprep.subr.bf16.mxu0 0
        %1032 = vmatpush1.bf16.msra.mxu0 0
        %1033 = vmatprep.subr.bf16.mxu0 0
        %1034 = vmatpush1.bf16.msra.mxu0 0
        %1035 = vmatprep.mubr.bf16.mxu0 0
        %1036 = vmatmul.mubr.bf16.gmra.mrb[0].mxu0 %v1002
        %v1037 = vpop.f32.mrb[0].mxu0
        %v1038 = vadd.f32 0.0, %v1037
        %v1039 = vpop.f32.mrb[0].mxu0
        %v1040 = vadd.f32 0.0, %v1039
        %v1041 = vpop.f32.mrb[0].mxu0
        %v1042 = vpop.f32.mrb[0].mxu0
        %1043 = vdwg.mxu0
        %1044 = vmatprep.subr.bf16.mxu0 %v706
        %1045 = vmatpush1.bf16.msra.mxu0 %v705
        %1046 = vmatprep.subr.bf16.mxu0 %v710
        %1047 = vmatpush1.bf16.msra.mxu0 %v709
        %1048 = vmatprep.subr.bf16.mxu0 %v714
        %1049 = vmatpush1.bf16.msra.mxu0 %v713
        %1050 = vmatprep.subr.bf16.mxu0 %v718
        %1051 = vmatpush1.bf16.msra.mxu0 %v717
        %1052 = vmatprep.subr.bf16.mxu0 %v722
        %1053 = vmatpush1.bf16.msra.mxu0 %v721
        %1054 = vmatprep.subr.bf16.mxu0 %v726
        %1055 = vmatpush1.bf16.msra.mxu0 %v725
        %1056 = vmatprep.subr.bf16.mxu0 %v730
        %1057 = vmatpush1.bf16.msra.mxu0 %v729
        %1058 = vmatprep.subr.bf16.mxu0 %v734
        %1059 = vmatpush1.bf16.msra.mxu0 %v733
        %1060 = vmatprep.subr.bf16.mxu0 0
        %1061 = vmatpush1.bf16.msra.mxu0 0
        %1062 = vmatprep.subr.bf16.mxu0 0
        %1063 = vmatpush1.bf16.msra.mxu0 0
        %1064 = vmatprep.subr.bf16.mxu0 0
        %1065 = vmatpush1.bf16.msra.mxu0 0
        %1066 = vmatprep.subr.bf16.mxu0 0
        %1067 = vmatpush1.bf16.msra.mxu0 0
        %1068 = vmatprep.subr.bf16.mxu0 0
        %1069 = vmatpush1.bf16.msra.mxu0 0
        %1070 = vmatprep.subr.bf16.mxu0 0
        %1071 = vmatpush1.bf16.msra.mxu0 0
        %1072 = vmatprep.subr.bf16.mxu0 0
        %1073 = vmatpush1.bf16.msra.mxu0 0
        %1074 = vmatprep.subr.bf16.mxu0 0
        %1075 = vmatpush1.bf16.msra.mxu0 0
        %1076 = vmatprep.mubr.bf16.mxu0 0
        %1077 = vmatmul.mubr.bf16.gmra.mrb[0].mxu0 %v1002
        %v1078 = vpop.f32.mrb[0].mxu0
        %v1079 = vadd.f32 0.0, %v1078
        %v1080 = vpop.f32.mrb[0].mxu0
        %v1081 = vadd.f32 0.0, %v1080
        %v1082 = vpop.f32.mrb[0].mxu0
        %v1083 = vpop.f32.mrb[0].mxu0
        %1084 = vdwg.mxu0
        %v1085 = vadd.f32 %v998, %v1038
        %v1086 = vadd.f32 %v999, %v1040
        %v1087 = vadd.f32 %v1000, %v1079
        %v1088 = vadd.f32 %v1001, %v1081
        %v1089 = vxor.u32 %v1085, 2147483648
        %v1090 = vxor.u32 %v1086, 2147483648
        %v1091 = vxor.u32 %v1087, 2147483648
        %v1092 = vmul.f32 %v1089, 1.442695
        %v1093 = vpow.pop %v1092
        %v1094 = vmul.f32 %v1090, 1.442695
        %v1095 = vpow.pop %v1094
        %v1096 = vmul.f32 %v1091, 1.442695
        %v1097 = vpow.pop %v1096
        %v1098 = vadd.f32 %v1093, 1.0
        %v1099 = vadd.f32 %v1095, 1.0
        %v1100 = vadd.f32 %v1097, 1.0
        %v1101 = vrcp.pop %v1098
        %v1102 = vmul.f32 1.0, %v1101
        %v1103 = vrcp.pop %v1099
        %v1104 = vmul.f32 1.0, %v1103
        %v1105 = vrcp.pop %v1100
        %v1106 = vmul.f32 1.0, %v1105
        %v1107 = vtanh.pop %v1088
        %v1108 = vmul.f32 %v1104, %v992
        %v1109 = vmul.f32 %v1102, %v1107
        %v1110 = vadd.f32 %v1108, %v1109
        %v1111 = vtanh.pop %v1110
        %v1112 = vmul.f32 %v1106, %v1111
        %s1113 = smul.u32 3, 4
        %s1114 = smul.addr %s1113, 8
        %s1115 = scalar_lea.vmem [#allocation4], %s1114
        %v1116 = vld [vmem:[%s1115] sm:$0xff]
        %v1117 = vld [vmem:[%s1115 + $0x8] sm:$0xff]
        %v1118 = vld [vmem:[%s1115 + $0x10] sm:$0xff]
        %v1119 = vld [vmem:[%s1115 + $0x18] sm:$0xff]
        %v1120 = vpack.c.bf16 %v1112, %v1112
        %1121 = vmatprep.subr.bf16.mxu0 %v704
        %1122 = vmatpush1.bf16.msra.mxu0 %v703
        %1123 = vmatprep.subr.bf16.mxu0 %v708
        %1124 = vmatpush1.bf16.msra.mxu0 %v707
        %1125 = vmatprep.subr.bf16.mxu0 %v712
        %1126 = vmatpush1.bf16.msra.mxu0 %v711
        %1127 = vmatprep.subr.bf16.mxu0 %v716
        %1128 = vmatpush1.bf16.msra.mxu0 %v715
        %1129 = vmatprep.subr.bf16.mxu0 %v720
        %1130 = vmatpush1.bf16.msra.mxu0 %v719
        %1131 = vmatprep.subr.bf16.mxu0 %v724
        %1132 = vmatpush1.bf16.msra.mxu0 %v723
        %1133 = vmatprep.subr.bf16.mxu0 %v728
        %1134 = vmatpush1.bf16.msra.mxu0 %v727
        %1135 = vmatprep.subr.bf16.mxu0 %v732
        %1136 = vmatpush1.bf16.msra.mxu0 %v731
        %1137 = vmatprep.subr.bf16.mxu0 0
        %1138 = vmatpush1.bf16.msra.mxu0 0
        %1139 = vmatprep.subr.bf16.mxu0 0
        %1140 = vmatpush1.bf16.msra.mxu0 0
        %1141 = vmatprep.subr.bf16.mxu0 0
        %1142 = vmatpush1.bf16.msra.mxu0 0
        %1143 = vmatprep.subr.bf16.mxu0 0
        %1144 = vmatpush1.bf16.msra.mxu0 0
        %1145 = vmatprep.subr.bf16.mxu0 0
        %1146 = vmatpush1.bf16.msra.mxu0 0
        %1147 = vmatprep.subr.bf16.mxu0 0
        %1148 = vmatpush1.bf16.msra.mxu0 0
        %1149 = vmatprep.subr.bf16.mxu0 0
        %1150 = vmatpush1.bf16.msra.mxu0 0
        %1151 = vmatprep.subr.bf16.mxu0 0
        %1152 = vmatpush1.bf16.msra.mxu0 0
        %1153 = vmatprep.mubr.bf16.mxu0 0
        %1154 = vmatmul.mubr.bf16.gmra.mrb[0].mxu0 %v1120
        %v1155 = vpop.f32.mrb[0].mxu0
        %v1156 = vadd.f32 0.0, %v1155
        %v1157 = vpop.f32.mrb[0].mxu0
        %v1158 = vadd.f32 0.0, %v1157
        %v1159 = vpop.f32.mrb[0].mxu0
        %v1160 = vpop.f32.mrb[0].mxu0
        %1161 = vdwg.mxu0
        %1162 = vmatprep.subr.bf16.mxu0 %v706
        %1163 = vmatpush1.bf16.msra.mxu0 %v705
        %1164 = vmatprep.subr.bf16.mxu0 %v710
        %1165 = vmatpush1.bf16.msra.mxu0 %v709
        %1166 = vmatprep.subr.bf16.mxu0 %v714
        %1167 = vmatpush1.bf16.msra.mxu0 %v713
        %1168 = vmatprep.subr.bf16.mxu0 %v718
        %1169 = vmatpush1.bf16.msra.mxu0 %v717
        %1170 = vmatprep.subr.bf16.mxu0 %v722
        %1171 = vmatpush1.bf16.msra.mxu0 %v721
        %1172 = vmatprep.subr.bf16.mxu0 %v726
        %1173 = vmatpush1.bf16.msra.mxu0 %v725
        %1174 = vmatprep.subr.bf16.mxu0 %v730
        %1175 = vmatpush1.bf16.msra.mxu0 %v729
        %1176 = vmatprep.subr.bf16.mxu0 %v734
        %1177 = vmatpush1.bf16.msra.mxu0 %v733
        %1178 = vmatprep.subr.bf16.mxu0 0
        %1179 = vmatpush1.bf16.msra.mxu0 0
        %1180 = vmatprep.subr.bf16.mxu0 0
        %1181 = vmatpush1.bf16.msra.mxu0 0
        %1182 = vmatprep.subr.bf16.mxu0 0
        %1183 = vmatpush1.bf16.msra.mxu0 0
        %1184 = vmatprep.subr.bf16.mxu0 0
        %1185 = vmatpush1.bf16.msra.mxu0 0
        %1186 = vmatprep.subr.bf16.mxu0 0
        %1187 = vmatpush1.bf16.msra.mxu0 0
        %1188 = vmatprep.subr.bf16.mxu0 0
        %1189 = vmatpush1.bf16.msra.mxu0 0
        %1190 = vmatprep.subr.bf16.mxu0 0
        %1191 = vmatpush1.bf16.msra.mxu0 0
        %1192 = vmatprep.subr.bf16.mxu0 0
        %1193 = vmatpush1.bf16.msra.mxu0 0
        %1194 = vmatprep.mubr.bf16.mxu0 0
        %1195 = vmatmul.mubr.bf16.gmra.mrb[0].mxu0 %v1120
        %v1196 = vpop.f32.mrb[0].mxu0
        %v1197 = vadd.f32 0.0, %v1196
        %v1198 = vpop.f32.mrb[0].mxu0
        %v1199 = vadd.f32 0.0, %v1198
        %v1200 = vpop.f32.mrb[0].mxu0
        %v1201 = vpop.f32.mrb[0].mxu0
        %1202 = vdwg.mxu0
        %v1203 = vadd.f32 %v1116, %v1156
        %v1204 = vadd.f32 %v1117, %v1158
        %v1205 = vadd.f32 %v1118, %v1197
        %v1206 = vadd.f32 %v1119, %v1199
        %v1207 = vxor.u32 %v1203, 2147483648
        %v1208 = vxor.u32 %v1204, 2147483648
        %v1209 = vxor.u32 %v1205, 2147483648
        %v1210 = vmul.f32 %v1207, 1.442695
        %v1211 = vpow.pop %v1210
        %v1212 = vmul.f32 %v1208, 1.442695
        %v1213 = vpow.pop %v1212
        %v1214 = vmul.f32 %v1209, 1.442695
        %v1215 = vpow.pop %v1214
        %v1216 = vadd.f32 %v1211, 1.0
        %v1217 = vadd.f32 %v1213, 1.0
        %v1218 = vadd.f32 %v1215, 1.0
        %v1219 = vrcp.pop %v1216
        %v1220 = vmul.f32 1.0, %v1219
        %v1221 = vrcp.pop %v1217
        %v1222 = vmul.f32 1.0, %v1221
        %v1223 = vrcp.pop %v1218
        %v1224 = vmul.f32 1.0, %v1223
        %v1225 = vtanh.pop %v1206
        %v1226 = vmul.f32 %v1222, %v1110
        %v1227 = vmul.f32 %v1220, %v1225
        %v1228 = vadd.f32 %v1226, %v1227
        %v1229 = vtanh.pop %v1228
        %v1230 = vmul.f32 %v1224, %v1229
        %1231 = vst [vmem:[#allocation2] sm:$0xff] %v1230
        %1232 = vst [vmem:[#allocation3] sm:$0xff] %v1228
        %p1233 = scmp.eq.s32.totalorder %s27, 1
        // Predicated region
        $region69: #{tpu_custom_call.1} parent=51 // pred_check
          %p1234 = pneg %p1233
        $region70: #{tpu_custom_call.1} parent=51 // pred_check_branch
          %1236 = sbr.rel (%p1234) target = $region72
        $region71: #{tpu_custom_call.1} parent=51 // pred_region
          %v1237 = vmax.f32 %v1230, 0.0
          %v1238 = vpack.c.bf16 %v1237, %v1237
          %v1239 = vld [vmem:[#allocation8] sm:$0xf]
          %v1240 = vld [vmem:[#allocation8 + $0x4] sm:$0xf]
          %v1241 = vld [vmem:[#allocation8 + $0x8] sm:$0xf]
          %v1242 = vld [vmem:[#allocation8 + $0xc] sm:$0xf]
          %v1243 = vld [vmem:[#allocation8 + $0x10] sm:$0xf]
          %v1244 = vld [vmem:[#allocation8 + $0x14] sm:$0xf]
          %v1245 = vld [vmem:[#allocation8 + $0x18] sm:$0xf]
          %v1246 = vld [vmem:[#allocation8 + $0x1c] sm:$0xf]
          %v1247 = vld [vmem:[#allocation8 + $0x20] sm:$0xf]
          %v1248 = vld [vmem:[#allocation8 + $0x24] sm:$0xf]
          %v1249 = vld [vmem:[#allocation8 + $0x28] sm:$0xf]
          %v1250 = vld [vmem:[#allocation8 + $0x2c] sm:$0xf]
          %v1251 = vld [vmem:[#allocation8 + $0x30] sm:$0xf]
          %v1252 = vld [vmem:[#allocation8 + $0x34] sm:$0xf]
          %v1253 = vld [vmem:[#allocation8 + $0x38] sm:$0xf]
          %v1254 = vld [vmem:[#allocation8 + $0x3c] sm:$0xf]
          %v1255 = vld [vmem:[%s5] sm:$0x1]
          %v1257 = vlaneseq
          %v1258 = vshrl.u32 %v1257, 7
          %v1259 = vsub.s32 0, %v1258
          %v1260 = vrot.slane %v1255, %v1259
          %v1278 = vunpack.c.l.b16 %v1239
          %v1279 = vunpack.c.l.b16 %v1240
          %v1280 = vunpack.c.l.b16 %v1241
          %v1281 = vunpack.c.l.b16 %v1242
          %v1282 = vunpack.c.l.b16 %v1243
          %v1283 = vunpack.c.l.b16 %v1244
          %v1284 = vunpack.c.l.b16 %v1245
          %v1285 = vunpack.c.l.b16 %v1246
          %v1286 = vunpack.c.l.b16 %v1247
          %v1287 = vunpack.c.l.b16 %v1248
          %v1288 = vunpack.c.l.b16 %v1249
          %v1289 = vunpack.c.l.b16 %v1250
          %v1290 = vunpack.c.l.b16 %v1251
          %v1291 = vunpack.c.l.b16 %v1252
          %v1292 = vunpack.c.l.b16 %v1253
          %v1293 = vunpack.c.l.b16 %v1254
          %v1294 = vpack.c.b16 %v1279, %v1278
          %v1295 = vpack.c.b16 %v1281, %v1280
          %v1296 = vpack.c.b16 %v1283, %v1282
          %v1297 = vpack.c.b16 %v1285, %v1284
          %v1298 = vpack.c.b16 %v1287, %v1286
          %v1299 = vpack.c.b16 %v1289, %v1288
          %v1300 = vpack.c.b16 %v1291, %v1290
          %v1301 = vpack.c.b16 %v1293, %v1292
          %1310 = vmatprep.subr.bf16.mxu0 0
          %1311 = vmatpush1.bf16.msra.mxu0 %v1294
          %1312 = vmatprep.subr.bf16.mxu0 0
          %1313 = vmatpush1.bf16.msra.mxu0 %v1295
          %1314 = vmatprep.subr.bf16.mxu0 0
          %1315 = vmatpush1.bf16.msra.mxu0 %v1296
          %1316 = vmatprep.subr.bf16.mxu0 0
          %1317 = vmatpush1.bf16.msra.mxu0 %v1297
          %1318 = vmatprep.subr.bf16.mxu0 0
          %1319 = vmatpush1.bf16.msra.mxu0 %v1298
          %1320 = vmatprep.subr.bf16.mxu0 0
          %1321 = vmatpush1.bf16.msra.mxu0 %v1299
          %1322 = vmatprep.subr.bf16.mxu0 0
          %1323 = vmatpush1.bf16.msra.mxu0 %v1300
          %1324 = vmatprep.subr.bf16.mxu0 0
          %1325 = vmatpush1.bf16.msra.mxu0 %v1301
          %1326 = vmatprep.subr.bf16.mxu0 0
          %1327 = vmatpush1.bf16.msra.mxu0 0
          %1328 = vmatprep.subr.bf16.mxu0 0
          %1329 = vmatpush1.bf16.msra.mxu0 0
          %1330 = vmatprep.subr.bf16.mxu0 0
          %1331 = vmatpush1.bf16.msra.mxu0 0
          %1332 = vmatprep.subr.bf16.mxu0 0
          %1333 = vmatpush1.bf16.msra.mxu0 0
          %1334 = vmatprep.subr.bf16.mxu0 0
          %1335 = vmatpush1.bf16.msra.mxu0 0
          %1336 = vmatprep.subr.bf16.mxu0 0
          %1337 = vmatpush1.bf16.msra.mxu0 0
          %1338 = vmatprep.subr.bf16.mxu0 0
          %1339 = vmatpush1.bf16.msra.mxu0 0
          %1340 = vmatprep.subr.bf16.mxu0 0
          %1341 = vmatpush1.bf16.msra.mxu0 0
          %1342 = vmatprep.mubr.bf16.mxu0 0
          %1343 = vmatmul.mubr.bf16.gmra.mrb[0].mxu0 %v1238
          %v1344 = vpop.f32.mrb[0].mxu0
          %v1345 = vadd.f32 %v1260, %v1344
          %v1346 = vpop.f32.mrb[0].mxu0
          %v1347 = vpop.f32.mrb[0].mxu0
          %v1348 = vpop.f32.mrb[0].mxu0
          %1349 = vdwg.mxu0
          %v1350 = vmax.f32 %v1345, 0.0
          %v1351 = vpack.c.bf16 %v1350, %v1350
          %v1352 = vld [vmem:[#allocation10] sm:$0xf]
          %v1353 = vld [vmem:[#allocation10 + $0x4] sm:$0xf]
          %v1354 = vld [vmem:[#allocation10 + $0x8] sm:$0xf]
          %v1355 = vld [vmem:[#allocation10 + $0xc] sm:$0xf]
          %v1356 = vld [vmem:[#allocation10 + $0x10] sm:$0xf]
          %v1357 = vld [vmem:[#allocation10 + $0x14] sm:$0xf]
          %v1358 = vld [vmem:[#allocation10 + $0x18] sm:$0xf]
          %v1359 = vld [vmem:[#allocation10 + $0x1c] sm:$0xf]
          %v1360 = vld [vmem:[#allocation10 + $0x20] sm:$0xf]
          %v1361 = vld [vmem:[#allocation10 + $0x24] sm:$0xf]
          %v1362 = vld [vmem:[#allocation10 + $0x28] sm:$0xf]
          %v1363 = vld [vmem:[#allocation10 + $0x2c] sm:$0xf]
          %v1364 = vld [vmem:[#allocation10 + $0x30] sm:$0xf]
          %v1365 = vld [vmem:[#allocation10 + $0x34] sm:$0xf]
          %v1366 = vld [vmem:[#allocation10 + $0x38] sm:$0xf]
          %v1367 = vld [vmem:[#allocation10 + $0x3c] sm:$0xf]
          %v1368 = vld [vmem:[%s7] sm:$0x1]
          %v1370 = vlaneseq
          %v1371 = vshrl.u32 %v1370, 7
          %v1372 = vsub.s32 0, %v1371
          %v1373 = vrot.slane %v1368, %v1372
          %v1391 = vunpack.c.l.b16 %v1352
          %v1392 = vunpack.c.l.b16 %v1353
          %v1393 = vunpack.c.l.b16 %v1354
          %v1394 = vunpack.c.l.b16 %v1355
          %v1395 = vunpack.c.l.b16 %v1356
          %v1396 = vunpack.c.l.b16 %v1357
          %v1397 = vunpack.c.l.b16 %v1358
          %v1398 = vunpack.c.l.b16 %v1359
          %v1399 = vunpack.c.l.b16 %v1360
          %v1400 = vunpack.c.l.b16 %v1361
          %v1401 = vunpack.c.l.b16 %v1362
          %v1402 = vunpack.c.l.b16 %v1363
          %v1403 = vunpack.c.l.b16 %v1364
          %v1404 = vunpack.c.l.b16 %v1365
          %v1405 = vunpack.c.l.b16 %v1366
          %v1406 = vunpack.c.l.b16 %v1367
          %v1407 = vpack.c.b16 %v1392, %v1391
          %v1408 = vpack.c.b16 %v1394, %v1393
          %v1409 = vpack.c.b16 %v1396, %v1395
          %v1410 = vpack.c.b16 %v1398, %v1397
          %v1411 = vpack.c.b16 %v1400, %v1399
          %v1412 = vpack.c.b16 %v1402, %v1401
          %v1413 = vpack.c.b16 %v1404, %v1403
          %v1414 = vpack.c.b16 %v1406, %v1405
          %1423 = vmatprep.subr.bf16.mxu0 0
          %1424 = vmatpush1.bf16.msra.mxu0 %v1407
          %1425 = vmatprep.subr.bf16.mxu0 0
          %1426 = vmatpush1.bf16.msra.mxu0 %v1408
          %1427 = vmatprep.subr.bf16.mxu0 0
          %1428 = vmatpush1.bf16.msra.mxu0 %v1409
          %1429 = vmatprep.subr.bf16.mxu0 0
          %1430 = vmatpush1.bf16.msra.mxu0 %v1410
          %1431 = vmatprep.subr.bf16.mxu0 0
          %1432 = vmatpush1.bf16.msra.mxu0 %v1411
          %1433 = vmatprep.subr.bf16.mxu0 0
          %1434 = vmatpush1.bf16.msra.mxu0 %v1412
          %1435 = vmatprep.subr.bf16.mxu0 0
          %1436 = vmatpush1.bf16.msra.mxu0 %v1413
          %1437 = vmatprep.subr.bf16.mxu0 0
          %1438 = vmatpush1.bf16.msra.mxu0 %v1414
          %1439 = vmatprep.subr.bf16.mxu0 0
          %1440 = vmatpush1.bf16.msra.mxu0 0
          %1441 = vmatprep.subr.bf16.mxu0 0
          %1442 = vmatpush1.bf16.msra.mxu0 0
          %1443 = vmatprep.subr.bf16.mxu0 0
          %1444 = vmatpush1.bf16.msra.mxu0 0
          %1445 = vmatprep.subr.bf16.mxu0 0
          %1446 = vmatpush1.bf16.msra.mxu0 0
          %1447 = vmatprep.subr.bf16.mxu0 0
          %1448 = vmatpush1.bf16.msra.mxu0 0
          %1449 = vmatprep.subr.bf16.mxu0 0
          %1450 = vmatpush1.bf16.msra.mxu0 0
          %1451 = vmatprep.subr.bf16.mxu0 0
          %1452 = vmatpush1.bf16.msra.mxu0 0
          %1453 = vmatprep.subr.bf16.mxu0 0
          %1454 = vmatpush1.bf16.msra.mxu0 0
          %1455 = vmatprep.mubr.bf16.mxu0 0
          %1456 = vmatmul.mubr.bf16.gmra.mrb[0].mxu0 %v1351
          %v1457 = vpop.f32.mrb[0].mxu0
          %v1458 = vadd.f32 %v1373, %v1457
          %v1459 = vpop.f32.mrb[0].mxu0
          %v1460 = vpop.f32.mrb[0].mxu0
          %v1461 = vpop.f32.mrb[0].mxu0
          %1462 = vdwg.mxu0
          %1463 = vst [vmem:[#allocation11] sm:$0xff] %v1458
        $region72: #{tpu_custom_call.1} parent=51 // pred_fallthru
          _
        // Predicated region
        $region73: #{tpu_custom_call.1} parent=51 // pred_check
          %p1464 = pneg %p229
        $region74: #{tpu_custom_call.1} parent=51 // pred_check_branch
          %1466 = sbr.rel (%p1464) target = $region76
        $region75: #{tpu_custom_call.1} parent=51 // pred_region
          %s1468 = ssub.s32 128, 128
          %1469 = vsyncadd [#allocation7], %s1468
          %s1470 = smul.addr %s26, 128
          %s1471 = scalar_lea.hbm %s8, %s1470
          %s1473 = sshll.u32 [#allocation11], 4
          %s1474 = int_to_ptr.vmem [resolvable:$true] %s1473
          %1476 = dma.vmem_to_hbm [thread:$0]  %s1474, 128, %s1471, [#allocation7]
        $region76: #{tpu_custom_call.1} parent=51 // pred_fallthru
          _
        // Predicated region
        $region77: #{tpu_custom_call.1} parent=51 // pred_check
          %p1477 = pneg %p229
        $region78: #{tpu_custom_call.1} parent=51 // pred_check_branch
          %1479 = sbr.rel (%p1477) target = $region80
        $region79: #{tpu_custom_call.1} parent=51 // pred_region
          %1480 = dma.done [#allocation7], 128
        $region80: #{tpu_custom_call.1} parent=51 // pred_fallthru
          _
      $region52: #{tpu_custom_call.1} parent=5 // pred_fallthru
        _
      %p1481 = scmp.le.s32.totalorder 2, %s17
      // Predicated region
      $region81: #{tpu_custom_call.1} parent=5 // pred_check
        %p1482 = pneg %p1481
      $region82: #{tpu_custom_call.1} parent=5 // pred_check_branch
        %1484 = sbr.rel (%p1482) target = $region84
      $region83: #{tpu_custom_call.1} parent=5 // pred_region
        %s1485 = ssub.s32 %s17, 2
      $region84: #{tpu_custom_call.1} parent=5 // pred_fallthru
        _
    $region6: #{tpu_custom_call.1} parent=1 // loop_footer
      %s21 = sadd.s32 1, %s17
    $region7: #{tpu_custom_call.1} parent=1 // loop_footer_branch
      %16 = sbr.rel target = $region3
    $region8: #{tpu_custom_call.1} parent=1 // loop_exit
      _
    %1486 = vsyncpa [#allocation6], 1
    %s1487 = scalar_lea.sflag [#allocation6], 1
    %1488 = vsyncpa %s1487, 1
    %1489 = vsyncpa [#allocation9], 1
    %1490 = vsyncpa [#allocation7], 1
    %s1491 = scalar_lea.sflag [#allocation7], 1
    %1492 = vsyncpa %s1491, 1

</llo_original>
